<compile_context>
chip_gen: v5e
topology: v5e:2x2
jax: 0.10.0
libtpu: 0.0.40
codegen_flags: <defaults>
</compile_context>

<pallas_src>
import functools

import jax
import jax.numpy as jnp
from jax.experimental import pallas as pl
from jax.experimental.pallas import tpu as pltpu

HIDDEN1 = 512
HIDDEN2 = 32
HIDDEN2_PAD = 128   # pad fc2/fc3 width to a full 128-lane vreg (zero columns)
TM_MAX = 1024       # row-tile cap: amortizes per-step overhead / weight pushes


def _mlp_kernel(x_ref, w1_ref, b1_ref, w2_ref, b2_ref, w3_ref, b3_ref, out_ref):
    tm = x_ref.shape[0]
    x = x_ref[...]                                            # (tm, f) f32

    # per-row L2 norm of the raw features (torch.norm(features, p=2, dim=2)):
    # VPU square + XLU lane reduction.
    mag = jnp.sqrt(jnp.sum(x * x, axis=-1))                   # (tm,)

    # fc1 -> relu   (bf16 MXU operands, f32 accumulation)
    # TODO(synk): nn.Dropout(0.6) is implemented as identity (eval mode).
    h1 = jnp.dot(x.astype(jnp.bfloat16), w1_ref[...],
                 preferred_element_type=jnp.float32)
    h1 = jnp.maximum(h1 + b1_ref[...], 0.0)                   # (tm, 512) f32

    # fc2 -> relu   (N padded to 128 zero columns -> lane-dense h2)
    h2 = jnp.dot(h1.astype(jnp.bfloat16), w2_ref[...],
                 preferred_element_type=jnp.float32)
    h2 = jnp.maximum(h2 + b2_ref[...], 0.0)                   # (tm, 128) f32

    # fc3 (output width 1) as a VPU multiply + lane reduction, then
    # relu -> sigmoid.  sigmoid via EUP exp + approx reciprocal (EUP slot is
    # otherwise idle in the epilogue).
    s = jnp.sum(h2 * w3_ref[...], axis=-1) + b3_ref[0]        # (tm,)
    s = jnp.maximum(s, 0.0)
    s = pl.reciprocal(1.0 + jnp.exp(-s), approx=True)         # sigmoid(relu(s))

    # Single fused lane-dense (2, tm) output block: row 0 = scores,
    # row 1 = feature magnitudes.  One relayout + one output DMA per step.
    out_ref[...] = jnp.concatenate([s.reshape(1, tm), mag.reshape(1, tm)],
                                   axis=0)


def mlp_scores_pallas(x2d, w1, b1, w2, b2, w3, b3):
    M, f = x2d.shape
    H1 = w1.shape[1]
    H2 = w2.shape[1]

    # --- tiling: rows padded to a multiple of 128 (lane-dense outputs), one
    # tile when it fits, otherwise 1024-row tiles.  No forced grid>=2: on the
    # single-TC v5e/v6e that is pure overhead, and on v7x large M naturally
    # gives >=2 "parallel" tiles for the two TensorCores.
    M_pad = ((M + 127) // 128) * 128
    tm = min(M_pad, TM_MAX)
    num_tiles = -(-M_pad // tm)
    M_pad = num_tiles * tm
    if M_pad != M:
        x2d = jnp.pad(x2d, ((0, M_pad - M), (0, 0)))

    # Pad the narrow fc2/fc3 operands out to 128 lanes with zero columns so the
    # h2 intermediate is lane-dense; zeros do not change the math.
    w2p = jnp.pad(w2, ((0, 0), (0, HIDDEN2_PAD - H2)))
    b2p = jnp.pad(b2, ((0, 0), (0, HIDDEN2_PAD - H2)))
    w3p = jnp.pad(w3.reshape(1, H2), ((0, 0), (0, HIDDEN2_PAD - H2)))

    # bf16 MXU operands (accumulation stays f32 inside the kernel).
    w1_bf = w1.astype(jnp.bfloat16)
    w2_bf = w2p.astype(jnp.bfloat16)

    # fc3 bias as an SMEM scalar (no VMEM (1,1) block / DMA descriptor).
    b3s = b3.reshape(1).astype(jnp.float32)

    cost = pl.CostEstimate(
        flops=2 * M_pad * (f * H1 + H1 * HIDDEN2_PAD)
        + 4 * M_pad * (HIDDEN2_PAD + f),
        transcendentals=2 * M_pad,
        bytes_accessed=M_pad * f * 4 + f * H1 * 2 + H1 * HIDDEN2_PAD * 2
        + (H1 + 2 * HIDDEN2_PAD + 1) * 4 + 2 * M_pad * 4,
    )

    out = pl.pallas_call(
        _mlp_kernel,
        out_shape=jax.ShapeDtypeStruct((2, M_pad), jnp.float32),
        grid=(num_tiles,),
        in_specs=[
            pl.BlockSpec((tm, f), lambda i: (i, 0)),
            pl.BlockSpec((f, H1), lambda i: (0, 0)),
            pl.BlockSpec((1, H1), lambda i: (0, 0)),
            pl.BlockSpec((H1, HIDDEN2_PAD), lambda i: (0, 0)),
            pl.BlockSpec((1, HIDDEN2_PAD), lambda i: (0, 0)),
            pl.BlockSpec((1, HIDDEN2_PAD), lambda i: (0, 0)),
            pl.BlockSpec(memory_space=pltpu.MemorySpace.SMEM),
        ],
        out_specs=pl.BlockSpec((2, tm), lambda i: (0, i)),   # fused, lane-dense
        compiler_params=pltpu.CompilerParams(
            dimension_semantics=("parallel",)),
        cost_estimate=cost,
    )(x2d, w1_bf, b1, w2_bf, b2p, w3p, b3s)
    return out[0, :M], out[1, :M]


def xavier_uniform(key, fan_in, fan_out):
    bound = (6.0 / (fan_in + fan_out)) ** 0.5
    return jax.random.uniform(key, (fan_in, fan_out), jnp.float32, -bound, bound)


def init_params(key, n_features):
    k1, k2, k3 = jax.random.split(key, 3)
    return dict(
        w1=xavier_uniform(k1, n_features, HIDDEN1),
        b1=jnp.zeros((1, HIDDEN1), jnp.float32),
        w2=xavier_uniform(k2, HIDDEN1, HIDDEN2),
        b2=jnp.zeros((1, HIDDEN2), jnp.float32),
        w3=xavier_uniform(k3, HIDDEN2, 1),
        b3=jnp.zeros((1, 1), jnp.float32),
    )


@functools.partial(jax.jit, static_argnames=("len_ninput", "len_ainput"))
def forward(params, ninput, ainput, *, len_ninput, len_ainput):
    num_segments = 32
    k_abn = num_segments // 10
    k_nor = num_segments // 10

    inputs = jnp.concatenate([ninput, ainput], axis=0)       # (bs, ncrops, t, f)
    bs, ncrops, t, f = inputs.shape
    features = inputs.reshape(-1, t, f)                      # (bs*ncrops, t, f)

    # --- Pallas hot path: MLP scores + L2 feature magnitudes ------------------
    x2d = features.reshape(-1, f)
    scores_flat, mags_flat = mlp_scores_pallas(
        x2d, params["w1"], params["b1"], params["w2"], params["b2"],
        params["w3"], params["b3"])

    scores = scores_flat.reshape(bs, ncrops, t).mean(axis=1)[..., None]  # (bs,t,1)
    feat_magnitudes = mags_flat.reshape(bs, ncrops, t).mean(axis=1)      # (bs,t)

    # --- glue: slicing / topk / gather.  NOTE: the abnormal branch is sliced
    # with len_ainput-based offsets, deliberately mirroring the torch
    # reference's indexing (it only differs from a len_ninput split when
    # len_ninput != len_ainput). ---------------------------------------------
    normal_features = features[0:len_ninput * ncrops]
    normal_scores = scores[0:len_ninput]
    abnormal_features = features[len_ainput * ncrops:]
    abnormal_scores = scores[len_ainput:]

    nfea_magnitudes = feat_magnitudes[0:len_ninput]
    afea_magnitudes = feat_magnitudes[len_ainput:]
    n_size = nfea_magnitudes.shape[0]

    if n_size == 1:  # static branch, mirrors the torch `if`
        afea_magnitudes = nfea_magnitudes
        abnormal_scores = normal_scores
        abnormal_features = normal_features

    # abnormal branch
    afea_magnitudes_drop = afea_magnitudes * jnp.ones_like(nfea_magnitudes)
    idx_abn = jax.lax.top_k(afea_magnitudes_drop, k_abn)[1]              # (n, k)
    abn_feats = abnormal_features.reshape(n_size, ncrops, t, f).transpose(1, 0, 2, 3)
    feat_select_abn = jnp.concatenate(
        [jnp.take_along_axis(abn_feats[c], idx_abn[:, :, None], axis=1)
         for c in range(ncrops)], axis=0)                                # (ncrops*n, k, f)
    score_abnormal = jnp.mean(
        jnp.take_along_axis(abnormal_scores, idx_abn[:, :, None], axis=1), axis=1)

    # normal branch
    nfea_magnitudes_drop = nfea_magnitudes * jnp.ones_like(nfea_magnitudes)
    idx_normal = jax.lax.top_k(nfea_magnitudes_drop, k_nor)[1]
    nor_feats = normal_features.reshape(n_size, ncrops, t, f).transpose(1, 0, 2, 3)
    feat_select_normal = jnp.concatenate(
        [jnp.take_along_axis(nor_feats[c], idx_normal[:, :, None], axis=1)
         for c in range(ncrops)], axis=0)
    score_normal = jnp.mean(
        jnp.take_along_axis(normal_scores, idx_normal[:, :, None], axis=1), axis=1)

    return (scores, normal_scores, score_normal, abnormal_scores,
            score_abnormal, feat_select_abn, feat_select_normal)


if __name__ == "__main__":
    # Small but consistent shapes: t matches num_segments (32),
    # rows = (len_n + len_a) * ncrops * t = 256 -> one 256-row tile (grid=1).
    n_features = 64
    len_ninput = 2
    len_ainput = 2
    ncrops = 2
    t = 32

    key = jax.random.PRNGKey(0)
    kp, kn, ka = jax.random.split(key, 3)
    params = init_params(kp, n_features)
    ninput = jax.random.normal(kn, (len_ninput, ncrops, t, n_features), jnp.float32)
    ainput = jax.random.normal(ka, (len_ainput, ncrops, t, n_features), jnp.float32)

    outs = forward(params, ninput, ainput,
                   len_ninput=len_ninput, len_ainput=len_ainput)
    outs = jax.block_until_ready(outs)

    (scores, normal_scores, score_normal, abnormal_scores,
     score_abnormal, feat_select_abn, feat_select_normal) = outs
    assert scores.shape == (len_ninput + len_ainput, t, 1)
    assert normal_scores.shape == (len_ninput, t, 1)
    assert score_normal.shape == (len_ninput, 1)
    assert score_abnormal.shape == (len_ninput, 1)
    assert feat_select_abn.shape == (ncrops * len_ninput, 3, n_features)
    assert feat_select_normal.shape == (ncrops * len_ninput, 3, n_features)
    print("KERNEL_OK")
</pallas_src>

<mosaic_0001>
module attributes {stable_mosaic.version = 11 : i64} {
  func.func @_mlp_kernel(%arg0: i32, %arg1: memref<256x64xf32, #tpu.memory_space<vmem>>, %arg2: memref<64x512xbf16, #tpu.memory_space<vmem>>, %arg3: memref<1x512xf32, #tpu.memory_space<vmem>>, %arg4: memref<512x128xbf16, #tpu.memory_space<vmem>>, %arg5: memref<1x128xf32, #tpu.memory_space<vmem>>, %arg6: memref<1x128xf32, #tpu.memory_space<vmem>>, %arg7: memref<1xf32, #tpu.memory_space<smem>>, %arg8: memref<2x256xf32, #tpu.memory_space<vmem>>) attributes {dimension_semantics = [#tpu.dimension_semantics<parallel>], iteration_bounds = array<i64: 1>, scalar_prefetch = 0 : i64, scratch_operands = 0 : i64, tpu.core_type = #tpu.core_type<tc>, window_params = [{transform_indices = @transform_0, window_bounds = array<i64: 256, 64>}, {pipeline_mode = #tpu.pipeline_mode<synchronous>, transform_indices = @transform_1, window_bounds = array<i64: 64, 512>}, {pipeline_mode = #tpu.pipeline_mode<synchronous>, transform_indices = @transform_2, window_bounds = array<i64: 1, 512>}, {pipeline_mode = #tpu.pipeline_mode<synchronous>, transform_indices = @transform_3, window_bounds = array<i64: 512, 128>}, {pipeline_mode = #tpu.pipeline_mode<synchronous>, transform_indices = @transform_4, window_bounds = array<i64: 1, 128>}, {pipeline_mode = #tpu.pipeline_mode<synchronous>, transform_indices = @transform_5, window_bounds = array<i64: 1, 128>}, {transform_indices = @transform_6, window_bounds = array<i64: 1>}, {transform_indices = @transform_7, window_bounds = array<i64: 2, 256>}]} {
    %c0 = arith.constant 0 : index
    %c0_0 = arith.constant 0 : index
    %0 = vector.load %arg1[%c0, %c0_0] : memref<256x64xf32, #tpu.memory_space<vmem>>, vector<256x64xf32>
    %1 = arith.mulf %0, %0 : vector<256x64xf32>
    %cst = arith.constant dense<0.000000e+00> : vector<256xf32>
    %2 = vector.multi_reduction <add>, %1, %cst [1] : vector<256x64xf32> to vector<256xf32>
    %3 = math.sqrt %2 : vector<256xf32>
    %4 = arith.truncf %0 : vector<256x64xf32> to vector<256x64xbf16>
    %c0_1 = arith.constant 0 : index
    %c0_2 = arith.constant 0 : index
    %5 = vector.load %arg2[%c0_1, %c0_2] : memref<64x512xbf16, #tpu.memory_space<vmem>>, vector<64x512xbf16>
    %cst_3 = arith.constant dense<0.000000e+00> : vector<256x512xf32>
    %6 = tpu.matmul %4, %5, %cst_3 {dimension_numbers = #tpu.dot_dimension_numbers<[1], [0], [0], [1], [0, 0, 1, 1], [], []>} : vector<256x64xbf16>, vector<64x512xbf16>, vector<256x512xf32> -> vector<256x512xf32>
    %c0_4 = arith.constant 0 : index
    %c0_5 = arith.constant 0 : index
    %7 = vector.load %arg3[%c0_4, %c0_5] : memref<1x512xf32, #tpu.memory_space<vmem>>, vector<1x512xf32>
    %8 = vector.broadcast %7 : vector<1x512xf32> to vector<256x512xf32>
    %9 = arith.addf %6, %8 : vector<256x512xf32>
    %cst_6 = arith.constant 0.000000e+00 : f32
    %10 = vector.broadcast %cst_6 : f32 to vector<256x512xf32>
    %11 = arith.maximumf %9, %10 : vector<256x512xf32>
    %12 = arith.truncf %11 : vector<256x512xf32> to vector<256x512xbf16>
    %c0_7 = arith.constant 0 : index
    %c0_8 = arith.constant 0 : index
    %13 = vector.load %arg4[%c0_7, %c0_8] : memref<512x128xbf16, #tpu.memory_space<vmem>>, vector<512x128xbf16>
    %cst_9 = arith.constant dense<0.000000e+00> : vector<256x128xf32>
    %14 = tpu.matmul %12, %13, %cst_9 {dimension_numbers = #tpu.dot_dimension_numbers<[1], [0], [0], [1], [0, 0, 1, 1], [], []>} : vector<256x512xbf16>, vector<512x128xbf16>, vector<256x128xf32> -> vector<256x128xf32>
    %c0_10 = arith.constant 0 : index
    %c0_11 = arith.constant 0 : index
    %15 = vector.load %arg5[%c0_10, %c0_11] : memref<1x128xf32, #tpu.memory_space<vmem>>, vector<1x128xf32>
    %16 = vector.broadcast %15 : vector<1x128xf32> to vector<256x128xf32>
    %17 = arith.addf %14, %16 : vector<256x128xf32>
    %cst_12 = arith.constant 0.000000e+00 : f32
    %18 = vector.broadcast %cst_12 : f32 to vector<256x128xf32>
    %19 = arith.maximumf %17, %18 : vector<256x128xf32>
    %c0_13 = arith.constant 0 : index
    %c0_14 = arith.constant 0 : index
    %20 = vector.load %arg6[%c0_13, %c0_14] : memref<1x128xf32, #tpu.memory_space<vmem>>, vector<1x128xf32>
    %21 = vector.broadcast %20 : vector<1x128xf32> to vector<256x128xf32>
    %22 = arith.mulf %19, %21 : vector<256x128xf32>
    %cst_15 = arith.constant dense<0.000000e+00> : vector<256xf32>
    %23 = vector.multi_reduction <add>, %22, %cst_15 [1] : vector<256x128xf32> to vector<256xf32>
    %c0_16 = arith.constant 0 : index
    %24 = memref.load %arg7[%c0_16] : memref<1xf32, #tpu.memory_space<smem>>
    %25 = vector.broadcast %24 : f32 to vector<256xf32>
    %26 = arith.addf %23, %25 : vector<256xf32>
    %cst_17 = arith.constant 0.000000e+00 : f32
    %27 = vector.broadcast %cst_17 : f32 to vector<256xf32>
    %28 = arith.maximumf %26, %27 : vector<256xf32>
    %cst_18 = arith.constant 0.000000e+00 : f32
    %29 = vector.broadcast %cst_18 : f32 to vector<256xf32>
    %30 = arith.subf %29, %28 : vector<256xf32>
    %31 = math.exp %30 : vector<256xf32>
    %cst_19 = arith.constant 1.000000e+00 : f32
    %32 = vector.broadcast %cst_19 : f32 to vector<256xf32>
    %33 = arith.addf %32, %31 : vector<256xf32>
    %34 = tpu.reciprocal %33 {approx = true} : vector<256xf32> -> vector<256xf32>
    %35 = vector.shape_cast %34 : vector<256xf32> to vector<1x256xf32>
    %36 = vector.shape_cast %3 : vector<256xf32> to vector<1x256xf32>
    %37 = tpu.concatenate %35, %36 in 0 : vector<1x256xf32>, vector<1x256xf32> -> vector<2x256xf32>
    %c0_20 = arith.constant 0 : index
    %c0_21 = arith.constant 0 : index
    %38 = vector.load %arg8[%c0_20, %c0_21] : memref<2x256xf32, #tpu.memory_space<vmem>>, vector<2x256xf32>
    tpu.vector_store %arg8[%c0_20, %c0_21], %37 {strides = array<i32>} : memref<2x256xf32, #tpu.memory_space<vmem>>, vector<2x256xf32>,
    return
  }
  func.func @transform_0(%arg0: i32) -> (i32, i32) {
    %c0_i32 = arith.constant 0 : i32
    %c0_i32_0 = arith.constant 0 : i32
    return %arg0, %c0_i32 : i32, i32
  }
  func.func @transform_1(%arg0: i32) -> (i32, i32) {
    %c0_i32 = arith.constant 0 : i32
    %c0_i32_0 = arith.constant 0 : i32
    %c0_i32_1 = arith.constant 0 : i32
    return %c0_i32, %c0_i32_0 : i32, i32
  }
  func.func @transform_2(%arg0: i32) -> (i32, i32) {
    %c0_i32 = arith.constant 0 : i32
    %c0_i32_0 = arith.constant 0 : i32
    %c0_i32_1 = arith.constant 0 : i32
    return %c0_i32, %c0_i32_0 : i32, i32
  }
  func.func @transform_3(%arg0: i32) -> (i32, i32) {
    %c0_i32 = arith.constant 0 : i32
    %c0_i32_0 = arith.constant 0 : i32
    %c0_i32_1 = arith.constant 0 : i32
    return %c0_i32, %c0_i32_0 : i32, i32
  }
  func.func @transform_4(%arg0: i32) -> (i32, i32) {
    %c0_i32 = arith.constant 0 : i32
    %c0_i32_0 = arith.constant 0 : i32
    %c0_i32_1 = arith.constant 0 : i32
    return %c0_i32, %c0_i32_0 : i32, i32
  }
  func.func @transform_5(%arg0: i32) -> (i32, i32) {
    %c0_i32 = arith.constant 0 : i32
    %c0_i32_0 = arith.constant 0 : i32
    %c0_i32_1 = arith.constant 0 : i32
    return %c0_i32, %c0_i32_0 : i32, i32
  }
  func.func @transform_6(%arg0: i32) -> i32 {
    %c0_i32 = arith.constant 0 : i32
    %c0_i32_0 = arith.constant 0 : i32
    return %c0_i32 : i32
  }
  func.func @transform_7(%arg0: i32) -> (i32, i32) {
    %c0_i32 = arith.constant 0 : i32
    %c0_i32_0 = arith.constant 0 : i32
    return %c0_i32, %arg0 : i32, i32
  }
}

</mosaic_0001>

<llo_original>
// kernel: squeeze.7
$region0: #{squeeze.7}
  %s0 = inlined_call_operand.vmem [shape: f32[256], index: 0, kind: input, shape index: {}]
  %s1 = inlined_call_operand.vmem [shape: f32[4,2,32], index: 1, kind: output, shape index: {}]
  $region1: #{squeeze.7} parent=0
    #allocation0 [shape = 'u8[16384]{0}', space=vmem, size = 0x4000, scoped, tag = 'scoped mem for output reshape']
    #allocation1 [shape = 'u8[4096]{0}', space=vmem, size = 0x1000, scoped, tag = 'scoped mem for input reshape']
    %s3 = ssub.s32 4, 1
    %v4 = vld [vmem:[%s0] sm:%s3]
    %5 = vst [vmem:[#allocation1] sm:%s3] %v4
    %v6 = vld [vmem:[#allocation1] sm:$0x3]
    %vm7 = vcmask 261120
    %8 = vst.msk [vmem:[#allocation0] ss:$16 sm:$0x3] %vm7, %v6
    %v9 = vld [vmem:[#allocation1] sm:$0x3]
    %10 = vrot.lane.b32.xlu0 %v9, 96
    %v11 = vpop.permute.xlu0 %10
    %vm12 = vcmask 261120
    %s13 = scalar_lea.vmem [#allocation0], 1
    %14 = vst.msk [vmem:[%s13] ss:$16 sm:$0x3] %vm12, %v11
    %v15 = vld [vmem:[#allocation1] sm:$0x3]
    %16 = vrot.lane.b32.xlu0 %v15, 64
    %v17 = vpop.permute.xlu0 %16
    %vm18 = vcmask 261120
    %s19 = scalar_lea.vmem [#allocation0], 8
    %20 = vst.msk [vmem:[%s19] ss:$16 sm:$0x3] %vm18, %v17
    %v21 = vld [vmem:[#allocation1] sm:$0x3]
    %22 = vrot.lane.b32.xlu0 %v21, 32
    %v23 = vpop.permute.xlu0 %22
    %vm24 = vcmask 261120
    %s25 = scalar_lea.vmem [#allocation0], 9
    %26 = vst.msk [vmem:[%s25] ss:$16 sm:$0x3] %vm24, %v23
    %s28 = ssub.s32 4, 1
    %v29 = vld [vmem:[#allocation0] sm:%s28]
    %s31 = ssub.s32 4, 1
    %32 = vst [vmem:[%s1] sm:%s31] %v29
    %s33 = scalar_lea.vmem [#allocation0], 8
    %v34 = vld [vmem:[%s33] sm:%s28]
    %s36 = ssub.s32 4, 1
    %s37 = scalar_lea.vmem %s1, 2
    %38 = vst [vmem:[%s37] sm:%s36] %v34
    %s39 = scalar_lea.vmem [#allocation0], 16
    %v40 = vld [vmem:[%s39] sm:%s28]
    %s42 = ssub.s32 4, 1
    %s43 = scalar_lea.vmem %s1, 4
    %44 = vst [vmem:[%s43] sm:%s42] %v40
    %s45 = scalar_lea.vmem [#allocation0], 24
    %v46 = vld [vmem:[%s45] sm:%s28]
    %s48 = ssub.s32 4, 1
    %s49 = scalar_lea.vmem %s1, 6
    %50 = vst [vmem:[%s49] sm:%s48] %v46

// kernel: forward.1
$region0: #{forward.1}
  #allocation0 [shape = 'u32[]', space=smem, size = 0x4, offset = 0x4, fixed_abs, tag = 'smem constant byte address 0x4 - core index']
  #allocation1 [shape = 'u32[72,128]{1,0:T(1,128)}', space=vmem, size = 0x9000, scoped, tag = 'internal scratch']
  #allocation2 [shape = 'f32[1]{0:T(128)S(6)}', space=smem, size = 0x200, scoped, tag = 'scoped memory for forward.1']
  %s0 = inlined_call_operand.vmem [shape: f32[256,64], index: 0, kind: input, shape index: {}]
  %s1 = inlined_call_operand.vmem [shape: bf16[64,512], index: 1, kind: input, shape index: {}]
  %s2 = inlined_call_operand.vmem [shape: f32[1,512], index: 2, kind: input, shape index: {}]
  %s3 = inlined_call_operand.vmem [shape: bf16[512,128], index: 3, kind: input, shape index: {}]
  %s4 = inlined_call_operand.vmem [shape: f32[1,128], index: 4, kind: input, shape index: {}]
  %s5 = inlined_call_operand.vmem [shape: f32[1,128], index: 5, kind: input, shape index: {}]
  %s6 = inlined_call_operand.<no memory space> [shape: f32[1], index: 6, kind: input, shape index: {}]
  %s7 = inlined_call_operand.vmem [shape: f32[2,256], index: 7, kind: output, shape index: {}]
  %s8 = sld [smem:[#allocation0]]
  $region38: #{forward.1} parent=0
    _
  %s10 = ssub.s32 1, %s8
  %s11 = scalar_select 0, %s10, %s8
  %12 = sst [smem:[#allocation2]] %s6
  // Predicated region
  $region2: #{forward.1} parent=0 // pred_check
    _
  $region3: #{forward.1} parent=0 // pred_check_branch
    %14 = sbr.rel (0) target = $region5
  $region4: #{forward.1} parent=0 // pred_region
    _
  $region5: #{forward.1} parent=0 // pred_fallthru
    _
  // Predicated region
  $region6: #{forward.1} parent=0 // pred_check
    _
  $region7: #{forward.1} parent=0 // pred_check_branch
    %16 = sbr.rel (0) target = $region9
  $region8: #{forward.1} parent=0 // pred_region
    _
  $region9: #{forward.1} parent=0 // pred_fallthru
    _
  // Predicated region
  $region10: #{forward.1} parent=0 // pred_check
    _
  $region11: #{forward.1} parent=0 // pred_check_branch
    %18 = sbr.rel (0) target = $region13
  $region12: #{forward.1} parent=0 // pred_region
    _
  $region13: #{forward.1} parent=0 // pred_fallthru
    _
  // Predicated region
  $region14: #{forward.1} parent=0 // pred_check
    _
  $region15: #{forward.1} parent=0 // pred_check_branch
    %20 = sbr.rel (0) target = $region17
  $region16: #{forward.1} parent=0 // pred_region
    _
  $region17: #{forward.1} parent=0 // pred_fallthru
    _
  // Predicated region
  $region18: #{forward.1} parent=0 // pred_check
    _
  $region19: #{forward.1} parent=0 // pred_check_branch
    %22 = sbr.rel (0) target = $region21
  $region20: #{forward.1} parent=0 // pred_region
    _
  $region21: #{forward.1} parent=0 // pred_fallthru
    _
  // Predicated region
  $region22: #{forward.1} parent=0 // pred_check
    _
  $region23: #{forward.1} parent=0 // pred_check_branch
    %24 = sbr.rel (0) target = $region25
  $region24: #{forward.1} parent=0 // pred_region
    _
  $region25: #{forward.1} parent=0 // pred_fallthru
    _
  // Predicated region
  $region26: #{forward.1} parent=0 // pred_check
    _
  $region27: #{forward.1} parent=0 // pred_check_branch
    %26 = sbr.rel (0) target = $region29
  $region28: #{forward.1} parent=0 // pred_region
    _
  $region29: #{forward.1} parent=0 // pred_fallthru
    _
  %v28 = vld [vmem:[%s0] sm:$0xff]
  %v29 = vld [vmem:[%s0 + $0x8] sm:$0xff]
  %v30 = vld [vmem:[%s0 + $0x10] sm:$0xff]
  %v31 = vld [vmem:[%s0 + $0x18] sm:$0xff]
  %v32 = vld [vmem:[%s0 + $0x20] sm:$0xff]
  %v33 = vld [vmem:[%s0 + $0x28] sm:$0xff]
  %v34 = vld [vmem:[%s0 + $0x30] sm:$0xff]
  %v35 = vld [vmem:[%s0 + $0x38] sm:$0xff]
  %v36 = vld [vmem:[%s0 + $0x40] sm:$0xff]
  %v37 = vld [vmem:[%s0 + $0x48] sm:$0xff]
  %v38 = vld [vmem:[%s0 + $0x50] sm:$0xff]
  %v39 = vld [vmem:[%s0 + $0x58] sm:$0xff]
  %v40 = vld [vmem:[%s0 + $0x60] sm:$0xff]
  %v41 = vld [vmem:[%s0 + $0x68] sm:$0xff]
  %v42 = vld [vmem:[%s0 + $0x70] sm:$0xff]
  %v43 = vld [vmem:[%s0 + $0x78] sm:$0xff]
  %v44 = vld [vmem:[%s0 + $0x80] sm:$0xff]
  %v45 = vld [vmem:[%s0 + $0x88] sm:$0xff]
  %v46 = vld [vmem:[%s0 + $0x90] sm:$0xff]
  %v47 = vld [vmem:[%s0 + $0x98] sm:$0xff]
  %v48 = vld [vmem:[%s0 + $0xa0] sm:$0xff]
  %v49 = vld [vmem:[%s0 + $0xa8] sm:$0xff]
  %v50 = vld [vmem:[%s0 + $0xb0] sm:$0xff]
  %v51 = vld [vmem:[%s0 + $0xb8] sm:$0xff]
  %v52 = vld [vmem:[%s0 + $0xc0] sm:$0xff]
  %v53 = vld [vmem:[%s0 + $0xc8] sm:$0xff]
  %v54 = vld [vmem:[%s0 + $0xd0] sm:$0xff]
  %v55 = vld [vmem:[%s0 + $0xd8] sm:$0xff]
  %v56 = vld [vmem:[%s0 + $0xe0] sm:$0xff]
  %v57 = vld [vmem:[%s0 + $0xe8] sm:$0xff]
  %v58 = vld [vmem:[%s0 + $0xf0] sm:$0xff]
  %v59 = vld [vmem:[%s0 + $0xf8] sm:$0xff]
  %v60 = vmul.f32 %v28, %v28
  %v61 = vmul.f32 %v29, %v29
  %v62 = vmul.f32 %v30, %v30
  %v63 = vmul.f32 %v31, %v31
  %v64 = vmul.f32 %v32, %v32
  %v65 = vmul.f32 %v33, %v33
  %v66 = vmul.f32 %v34, %v34
  %v67 = vmul.f32 %v35, %v35
  %v68 = vmul.f32 %v36, %v36
  %v69 = vmul.f32 %v37, %v37
  %v70 = vmul.f32 %v38, %v38
  %v71 = vmul.f32 %v39, %v39
  %v72 = vmul.f32 %v40, %v40
  %v73 = vmul.f32 %v41, %v41
  %v74 = vmul.f32 %v42, %v42
  %v75 = vmul.f32 %v43, %v43
  %v76 = vmul.f32 %v44, %v44
  %v77 = vmul.f32 %v45, %v45
  %v78 = vmul.f32 %v46, %v46
  %v79 = vmul.f32 %v47, %v47
  %v80 = vmul.f32 %v48, %v48
  %v81 = vmul.f32 %v49, %v49
  %v82 = vmul.f32 %v50, %v50
  %v83 = vmul.f32 %v51, %v51
  %v84 = vmul.f32 %v52, %v52
  %v85 = vmul.f32 %v53, %v53
  %v86 = vmul.f32 %v54, %v54
  %v87 = vmul.f32 %v55, %v55
  %v88 = vmul.f32 %v56, %v56
  %v89 = vmul.f32 %v57, %v57
  %v90 = vmul.f32 %v58, %v58
  %v91 = vmul.f32 %v59, %v59
  %vm92 = vcmask 523264
  %v93 = vsel %vm92, %v60, 0.0
  %94 = vadd.xlane.f32.xlu0 %v93
  %v95 = vpop.xlane.xlu0 %94
  %v96 = vsel %vm92, %v61, 0.0
  %97 = vadd.xlane.f32.xlu0 %v96
  %v98 = vpop.xlane.xlu0 %97
  %v99 = vsel %vm92, %v62, 0.0
  %100 = vadd.xlane.f32.xlu0 %v99
  %v101 = vpop.xlane.xlu0 %100
  %v102 = vsel %vm92, %v63, 0.0
  %103 = vadd.xlane.f32.xlu0 %v102
  %v104 = vpop.xlane.xlu0 %103
  %v105 = vsel %vm92, %v64, 0.0
  %106 = vadd.xlane.f32.xlu0 %v105
  %v107 = vpop.xlane.xlu0 %106
  %v108 = vsel %vm92, %v65, 0.0
  %109 = vadd.xlane.f32.xlu0 %v108
  %v110 = vpop.xlane.xlu0 %109
  %v111 = vsel %vm92, %v66, 0.0
  %112 = vadd.xlane.f32.xlu0 %v111
  %v113 = vpop.xlane.xlu0 %112
  %v114 = vsel %vm92, %v67, 0.0
  %115 = vadd.xlane.f32.xlu0 %v114
  %v116 = vpop.xlane.xlu0 %115
  %v117 = vsel %vm92, %v68, 0.0
  %118 = vadd.xlane.f32.xlu0 %v117
  %v119 = vpop.xlane.xlu0 %118
  %v120 = vsel %vm92, %v69, 0.0
  %121 = vadd.xlane.f32.xlu0 %v120
  %v122 = vpop.xlane.xlu0 %121
  %v123 = vsel %vm92, %v70, 0.0
  %124 = vadd.xlane.f32.xlu0 %v123
  %v125 = vpop.xlane.xlu0 %124
  %v126 = vsel %vm92, %v71, 0.0
  %127 = vadd.xlane.f32.xlu0 %v126
  %v128 = vpop.xlane.xlu0 %127
  %v129 = vsel %vm92, %v72, 0.0
  %130 = vadd.xlane.f32.xlu0 %v129
  %v131 = vpop.xlane.xlu0 %130
  %v132 = vsel %vm92, %v73, 0.0
  %133 = vadd.xlane.f32.xlu0 %v132
  %v134 = vpop.xlane.xlu0 %133
  %v135 = vsel %vm92, %v74, 0.0
  %136 = vadd.xlane.f32.xlu0 %v135
  %v137 = vpop.xlane.xlu0 %136
  %v138 = vsel %vm92, %v75, 0.0
  %139 = vadd.xlane.f32.xlu0 %v138
  %v140 = vpop.xlane.xlu0 %139
  %v141 = vsel %vm92, %v76, 0.0
  %142 = vadd.xlane.f32.xlu0 %v141
  %v143 = vpop.xlane.xlu0 %142
  %v144 = vsel %vm92, %v77, 0.0
  %145 = vadd.xlane.f32.xlu0 %v144
  %v146 = vpop.xlane.xlu0 %145
  %v147 = vsel %vm92, %v78, 0.0
  %148 = vadd.xlane.f32.xlu0 %v147
  %v149 = vpop.xlane.xlu0 %148
  %v150 = vsel %vm92, %v79, 0.0
  %151 = vadd.xlane.f32.xlu0 %v150
  %v152 = vpop.xlane.xlu0 %151
  %v153 = vsel %vm92, %v80, 0.0
  %154 = vadd.xlane.f32.xlu0 %v153
  %v155 = vpop.xlane.xlu0 %154
  %v156 = vsel %vm92, %v81, 0.0
  %157 = vadd.xlane.f32.xlu0 %v156
  %v158 = vpop.xlane.xlu0 %157
  %v159 = vsel %vm92, %v82, 0.0
  %160 = vadd.xlane.f32.xlu0 %v159
  %v161 = vpop.xlane.xlu0 %160
  %v162 = vsel %vm92, %v83, 0.0
  %163 = vadd.xlane.f32.xlu0 %v162
  %v164 = vpop.xlane.xlu0 %163
  %v165 = vsel %vm92, %v84, 0.0
  %166 = vadd.xlane.f32.xlu0 %v165
  %v167 = vpop.xlane.xlu0 %166
  %v168 = vsel %vm92, %v85, 0.0
  %169 = vadd.xlane.f32.xlu0 %v168
  %v170 = vpop.xlane.xlu0 %169
  %v171 = vsel %vm92, %v86, 0.0
  %172 = vadd.xlane.f32.xlu0 %v171
  %v173 = vpop.xlane.xlu0 %172
  %v174 = vsel %vm92, %v87, 0.0
  %175 = vadd.xlane.f32.xlu0 %v174
  %v176 = vpop.xlane.xlu0 %175
  %v177 = vsel %vm92, %v88, 0.0
  %178 = vadd.xlane.f32.xlu0 %v177
  %v179 = vpop.xlane.xlu0 %178
  %v180 = vsel %vm92, %v89, 0.0
  %181 = vadd.xlane.f32.xlu0 %v180
  %v182 = vpop.xlane.xlu0 %181
  %v183 = vsel %vm92, %v90, 0.0
  %184 = vadd.xlane.f32.xlu0 %v183
  %v185 = vpop.xlane.xlu0 %184
  %v186 = vsel %vm92, %v91, 0.0
  %187 = vadd.xlane.f32.xlu0 %v186
  %v188 = vpop.xlane.xlu0 %187
  %v189 = vrsqrt.pop %v95
  %v190 = vmul.f32 %v189, %v95
  %v191 = vmul.f32 %v190, %v189
  %v192 = vmul.f32 0.5, %v191
  %v193 = vsub.f32 1.5, %v192
  %v194 = vmul.f32 %v189, %v193
  %v195 = vmul.f32 %v95, %v194
  %vm196 = vcmp.eq.f32.partialorder %v95, inf
  %v197 = vsel %vm196, %v95, %v195
  %vm198 = vcmp.eq.f32.partialorder %v95, 0.0
  %v199 = vand.u32 %v95, 2147483648
  %v200 = vsel %vm198, %v199, %v197
  %v201 = vrsqrt.pop %v98
  %v202 = vmul.f32 %v201, %v98
  %v203 = vmul.f32 %v202, %v201
  %v204 = vmul.f32 0.5, %v203
  %v205 = vsub.f32 1.5, %v204
  %v206 = vmul.f32 %v201, %v205
  %v207 = vmul.f32 %v98, %v206
  %vm208 = vcmp.eq.f32.partialorder %v98, inf
  %v209 = vsel %vm208, %v98, %v207
  %vm210 = vcmp.eq.f32.partialorder %v98, 0.0
  %v211 = vand.u32 %v98, 2147483648
  %v212 = vsel %vm210, %v211, %v209
  %v213 = vrsqrt.pop %v101
  %v214 = vmul.f32 %v213, %v101
  %v215 = vmul.f32 %v214, %v213
  %v216 = vmul.f32 0.5, %v215
  %v217 = vsub.f32 1.5, %v216
  %v218 = vmul.f32 %v213, %v217
  %v219 = vmul.f32 %v101, %v218
  %vm220 = vcmp.eq.f32.partialorder %v101, inf
  %v221 = vsel %vm220, %v101, %v219
  %vm222 = vcmp.eq.f32.partialorder %v101, 0.0
  %v223 = vand.u32 %v101, 2147483648
  %v224 = vsel %vm222, %v223, %v221
  %v225 = vrsqrt.pop %v104
  %v226 = vmul.f32 %v225, %v104
  %v227 = vmul.f32 %v226, %v225
  %v228 = vmul.f32 0.5, %v227
  %v229 = vsub.f32 1.5, %v228
  %v230 = vmul.f32 %v225, %v229
  %v231 = vmul.f32 %v104, %v230
  %vm232 = vcmp.eq.f32.partialorder %v104, inf
  %v233 = vsel %vm232, %v104, %v231
  %vm234 = vcmp.eq.f32.partialorder %v104, 0.0
  %v235 = vand.u32 %v104, 2147483648
  %v236 = vsel %vm234, %v235, %v233
  %v237 = vrsqrt.pop %v107
  %v238 = vmul.f32 %v237, %v107
  %v239 = vmul.f32 %v238, %v237
  %v240 = vmul.f32 0.5, %v239
  %v241 = vsub.f32 1.5, %v240
  %v242 = vmul.f32 %v237, %v241
  %v243 = vmul.f32 %v107, %v242
  %vm244 = vcmp.eq.f32.partialorder %v107, inf
  %v245 = vsel %vm244, %v107, %v243
  %vm246 = vcmp.eq.f32.partialorder %v107, 0.0
  %v247 = vand.u32 %v107, 2147483648
  %v248 = vsel %vm246, %v247, %v245
  %v249 = vrsqrt.pop %v110
  %v250 = vmul.f32 %v249, %v110
  %v251 = vmul.f32 %v250, %v249
  %v252 = vmul.f32 0.5, %v251
  %v253 = vsub.f32 1.5, %v252
  %v254 = vmul.f32 %v249, %v253
  %v255 = vmul.f32 %v110, %v254
  %vm256 = vcmp.eq.f32.partialorder %v110, inf
  %v257 = vsel %vm256, %v110, %v255
  %vm258 = vcmp.eq.f32.partialorder %v110, 0.0
  %v259 = vand.u32 %v110, 2147483648
  %v260 = vsel %vm258, %v259, %v257
  %v261 = vrsqrt.pop %v113
  %v262 = vmul.f32 %v261, %v113
  %v263 = vmul.f32 %v262, %v261
  %v264 = vmul.f32 0.5, %v263
  %v265 = vsub.f32 1.5, %v264
  %v266 = vmul.f32 %v261, %v265
  %v267 = vmul.f32 %v113, %v266
  %vm268 = vcmp.eq.f32.partialorder %v113, inf
  %v269 = vsel %vm268, %v113, %v267
  %vm270 = vcmp.eq.f32.partialorder %v113, 0.0
  %v271 = vand.u32 %v113, 2147483648
  %v272 = vsel %vm270, %v271, %v269
  %v273 = vrsqrt.pop %v116
  %v274 = vmul.f32 %v273, %v116
  %v275 = vmul.f32 %v274, %v273
  %v276 = vmul.f32 0.5, %v275
  %v277 = vsub.f32 1.5, %v276
  %v278 = vmul.f32 %v273, %v277
  %v279 = vmul.f32 %v116, %v278
  %vm280 = vcmp.eq.f32.partialorder %v116, inf
  %v281 = vsel %vm280, %v116, %v279
  %vm282 = vcmp.eq.f32.partialorder %v116, 0.0
  %v283 = vand.u32 %v116, 2147483648
  %v284 = vsel %vm282, %v283, %v281
  %v285 = vrsqrt.pop %v119
  %v286 = vmul.f32 %v285, %v119
  %v287 = vmul.f32 %v286, %v285
  %v288 = vmul.f32 0.5, %v287
  %v289 = vsub.f32 1.5, %v288
  %v290 = vmul.f32 %v285, %v289
  %v291 = vmul.f32 %v119, %v290
  %vm292 = vcmp.eq.f32.partialorder %v119, inf
  %v293 = vsel %vm292, %v119, %v291
  %vm294 = vcmp.eq.f32.partialorder %v119, 0.0
  %v295 = vand.u32 %v119, 2147483648
  %v296 = vsel %vm294, %v295, %v293
  %v297 = vrsqrt.pop %v122
  %v298 = vmul.f32 %v297, %v122
  %v299 = vmul.f32 %v298, %v297
  %v300 = vmul.f32 0.5, %v299
  %v301 = vsub.f32 1.5, %v300
  %v302 = vmul.f32 %v297, %v301
  %v303 = vmul.f32 %v122, %v302
  %vm304 = vcmp.eq.f32.partialorder %v122, inf
  %v305 = vsel %vm304, %v122, %v303
  %vm306 = vcmp.eq.f32.partialorder %v122, 0.0
  %v307 = vand.u32 %v122, 2147483648
  %v308 = vsel %vm306, %v307, %v305
  %v309 = vrsqrt.pop %v125
  %v310 = vmul.f32 %v309, %v125
  %v311 = vmul.f32 %v310, %v309
  %v312 = vmul.f32 0.5, %v311
  %v313 = vsub.f32 1.5, %v312
  %v314 = vmul.f32 %v309, %v313
  %v315 = vmul.f32 %v125, %v314
  %vm316 = vcmp.eq.f32.partialorder %v125, inf
  %v317 = vsel %vm316, %v125, %v315
  %vm318 = vcmp.eq.f32.partialorder %v125, 0.0
  %v319 = vand.u32 %v125, 2147483648
  %v320 = vsel %vm318, %v319, %v317
  %v321 = vrsqrt.pop %v128
  %v322 = vmul.f32 %v321, %v128
  %v323 = vmul.f32 %v322, %v321
  %v324 = vmul.f32 0.5, %v323
  %v325 = vsub.f32 1.5, %v324
  %v326 = vmul.f32 %v321, %v325
  %v327 = vmul.f32 %v128, %v326
  %vm328 = vcmp.eq.f32.partialorder %v128, inf
  %v329 = vsel %vm328, %v128, %v327
  %vm330 = vcmp.eq.f32.partialorder %v128, 0.0
  %v331 = vand.u32 %v128, 2147483648
  %v332 = vsel %vm330, %v331, %v329
  %v333 = vrsqrt.pop %v131
  %v334 = vmul.f32 %v333, %v131
  %v335 = vmul.f32 %v334, %v333
  %v336 = vmul.f32 0.5, %v335
  %v337 = vsub.f32 1.5, %v336
  %v338 = vmul.f32 %v333, %v337
  %v339 = vmul.f32 %v131, %v338
  %vm340 = vcmp.eq.f32.partialorder %v131, inf
  %v341 = vsel %vm340, %v131, %v339
  %vm342 = vcmp.eq.f32.partialorder %v131, 0.0
  %v343 = vand.u32 %v131, 2147483648
  %v344 = vsel %vm342, %v343, %v341
  %v345 = vrsqrt.pop %v134
  %v346 = vmul.f32 %v345, %v134
  %v347 = vmul.f32 %v346, %v345
  %v348 = vmul.f32 0.5, %v347
  %v349 = vsub.f32 1.5, %v348
  %v350 = vmul.f32 %v345, %v349
  %v351 = vmul.f32 %v134, %v350
  %vm352 = vcmp.eq.f32.partialorder %v134, inf
  %v353 = vsel %vm352, %v134, %v351
  %vm354 = vcmp.eq.f32.partialorder %v134, 0.0
  %v355 = vand.u32 %v134, 2147483648
  %v356 = vsel %vm354, %v355, %v353
  %v357 = vrsqrt.pop %v137
  %v358 = vmul.f32 %v357, %v137
  %v359 = vmul.f32 %v358, %v357
  %v360 = vmul.f32 0.5, %v359
  %v361 = vsub.f32 1.5, %v360
  %v362 = vmul.f32 %v357, %v361
  %v363 = vmul.f32 %v137, %v362
  %vm364 = vcmp.eq.f32.partialorder %v137, inf
  %v365 = vsel %vm364, %v137, %v363
  %vm366 = vcmp.eq.f32.partialorder %v137, 0.0
  %v367 = vand.u32 %v137, 2147483648
  %v368 = vsel %vm366, %v367, %v365
  %v369 = vrsqrt.pop %v140
  %v370 = vmul.f32 %v369, %v140
  %v371 = vmul.f32 %v370, %v369
  %v372 = vmul.f32 0.5, %v371
  %v373 = vsub.f32 1.5, %v372
  %v374 = vmul.f32 %v369, %v373
  %v375 = vmul.f32 %v140, %v374
  %vm376 = vcmp.eq.f32.partialorder %v140, inf
  %v377 = vsel %vm376, %v140, %v375
  %vm378 = vcmp.eq.f32.partialorder %v140, 0.0
  %v379 = vand.u32 %v140, 2147483648
  %v380 = vsel %vm378, %v379, %v377
  %v381 = vrsqrt.pop %v143
  %v382 = vmul.f32 %v381, %v143
  %v383 = vmul.f32 %v382, %v381
  %v384 = vmul.f32 0.5, %v383
  %v385 = vsub.f32 1.5, %v384
  %v386 = vmul.f32 %v381, %v385
  %v387 = vmul.f32 %v143, %v386
  %vm388 = vcmp.eq.f32.partialorder %v143, inf
  %v389 = vsel %vm388, %v143, %v387
  %vm390 = vcmp.eq.f32.partialorder %v143, 0.0
  %v391 = vand.u32 %v143, 2147483648
  %v392 = vsel %vm390, %v391, %v389
  %v393 = vrsqrt.pop %v146
  %v394 = vmul.f32 %v393, %v146
  %v395 = vmul.f32 %v394, %v393
  %v396 = vmul.f32 0.5, %v395
  %v397 = vsub.f32 1.5, %v396
  %v398 = vmul.f32 %v393, %v397
  %v399 = vmul.f32 %v146, %v398
  %vm400 = vcmp.eq.f32.partialorder %v146, inf
  %v401 = vsel %vm400, %v146, %v399
  %vm402 = vcmp.eq.f32.partialorder %v146, 0.0
  %v403 = vand.u32 %v146, 2147483648
  %v404 = vsel %vm402, %v403, %v401
  %v405 = vrsqrt.pop %v149
  %v406 = vmul.f32 %v405, %v149
  %v407 = vmul.f32 %v406, %v405
  %v408 = vmul.f32 0.5, %v407
  %v409 = vsub.f32 1.5, %v408
  %v410 = vmul.f32 %v405, %v409
  %v411 = vmul.f32 %v149, %v410
  %vm412 = vcmp.eq.f32.partialorder %v149, inf
  %v413 = vsel %vm412, %v149, %v411
  %vm414 = vcmp.eq.f32.partialorder %v149, 0.0
  %v415 = vand.u32 %v149, 2147483648
  %v416 = vsel %vm414, %v415, %v413
  %v417 = vrsqrt.pop %v152
  %v418 = vmul.f32 %v417, %v152
  %v419 = vmul.f32 %v418, %v417
  %v420 = vmul.f32 0.5, %v419
  %v421 = vsub.f32 1.5, %v420
  %v422 = vmul.f32 %v417, %v421
  %v423 = vmul.f32 %v152, %v422
  %vm424 = vcmp.eq.f32.partialorder %v152, inf
  %v425 = vsel %vm424, %v152, %v423
  %vm426 = vcmp.eq.f32.partialorder %v152, 0.0
  %v427 = vand.u32 %v152, 2147483648
  %v428 = vsel %vm426, %v427, %v425
  %v429 = vrsqrt.pop %v155
  %v430 = vmul.f32 %v429, %v155
  %v431 = vmul.f32 %v430, %v429
  %v432 = vmul.f32 0.5, %v431
  %v433 = vsub.f32 1.5, %v432
  %v434 = vmul.f32 %v429, %v433
  %v435 = vmul.f32 %v155, %v434
  %vm436 = vcmp.eq.f32.partialorder %v155, inf
  %v437 = vsel %vm436, %v155, %v435
  %vm438 = vcmp.eq.f32.partialorder %v155, 0.0
  %v439 = vand.u32 %v155, 2147483648
  %v440 = vsel %vm438, %v439, %v437
  %v441 = vrsqrt.pop %v158
  %v442 = vmul.f32 %v441, %v158
  %v443 = vmul.f32 %v442, %v441
  %v444 = vmul.f32 0.5, %v443
  %v445 = vsub.f32 1.5, %v444
  %v446 = vmul.f32 %v441, %v445
  %v447 = vmul.f32 %v158, %v446
  %vm448 = vcmp.eq.f32.partialorder %v158, inf
  %v449 = vsel %vm448, %v158, %v447
  %vm450 = vcmp.eq.f32.partialorder %v158, 0.0
  %v451 = vand.u32 %v158, 2147483648
  %v452 = vsel %vm450, %v451, %v449
  %v453 = vrsqrt.pop %v161
  %v454 = vmul.f32 %v453, %v161
  %v455 = vmul.f32 %v454, %v453
  %v456 = vmul.f32 0.5, %v455
  %v457 = vsub.f32 1.5, %v456
  %v458 = vmul.f32 %v453, %v457
  %v459 = vmul.f32 %v161, %v458
  %vm460 = vcmp.eq.f32.partialorder %v161, inf
  %v461 = vsel %vm460, %v161, %v459
  %vm462 = vcmp.eq.f32.partialorder %v161, 0.0
  %v463 = vand.u32 %v161, 2147483648
  %v464 = vsel %vm462, %v463, %v461
  %v465 = vrsqrt.pop %v164
  %v466 = vmul.f32 %v465, %v164
  %v467 = vmul.f32 %v466, %v465
  %v468 = vmul.f32 0.5, %v467
  %v469 = vsub.f32 1.5, %v468
  %v470 = vmul.f32 %v465, %v469
  %v471 = vmul.f32 %v164, %v470
  %vm472 = vcmp.eq.f32.partialorder %v164, inf
  %v473 = vsel %vm472, %v164, %v471
  %vm474 = vcmp.eq.f32.partialorder %v164, 0.0
  %v475 = vand.u32 %v164, 2147483648
  %v476 = vsel %vm474, %v475, %v473
  %v477 = vrsqrt.pop %v167
  %v478 = vmul.f32 %v477, %v167
  %v479 = vmul.f32 %v478, %v477
  %v480 = vmul.f32 0.5, %v479
  %v481 = vsub.f32 1.5, %v480
  %v482 = vmul.f32 %v477, %v481
  %v483 = vmul.f32 %v167, %v482
  %vm484 = vcmp.eq.f32.partialorder %v167, inf
  %v485 = vsel %vm484, %v167, %v483
  %vm486 = vcmp.eq.f32.partialorder %v167, 0.0
  %v487 = vand.u32 %v167, 2147483648
  %v488 = vsel %vm486, %v487, %v485
  %v489 = vrsqrt.pop %v170
  %v490 = vmul.f32 %v489, %v170
  %v491 = vmul.f32 %v490, %v489
  %v492 = vmul.f32 0.5, %v491
  %v493 = vsub.f32 1.5, %v492
  %v494 = vmul.f32 %v489, %v493
  %v495 = vmul.f32 %v170, %v494
  %vm496 = vcmp.eq.f32.partialorder %v170, inf
  %v497 = vsel %vm496, %v170, %v495
  %vm498 = vcmp.eq.f32.partialorder %v170, 0.0
  %v499 = vand.u32 %v170, 2147483648
  %v500 = vsel %vm498, %v499, %v497
  %v501 = vrsqrt.pop %v173
  %v502 = vmul.f32 %v501, %v173
  %v503 = vmul.f32 %v502, %v501
  %v504 = vmul.f32 0.5, %v503
  %v505 = vsub.f32 1.5, %v504
  %v506 = vmul.f32 %v501, %v505
  %v507 = vmul.f32 %v173, %v506
  %vm508 = vcmp.eq.f32.partialorder %v173, inf
  %v509 = vsel %vm508, %v173, %v507
  %vm510 = vcmp.eq.f32.partialorder %v173, 0.0
  %v511 = vand.u32 %v173, 2147483648
  %v512 = vsel %vm510, %v511, %v509
  %v513 = vrsqrt.pop %v176
  %v514 = vmul.f32 %v513, %v176
  %v515 = vmul.f32 %v514, %v513
  %v516 = vmul.f32 0.5, %v515
  %v517 = vsub.f32 1.5, %v516
  %v518 = vmul.f32 %v513, %v517
  %v519 = vmul.f32 %v176, %v518
  %vm520 = vcmp.eq.f32.partialorder %v176, inf
  %v521 = vsel %vm520, %v176, %v519
  %vm522 = vcmp.eq.f32.partialorder %v176, 0.0
  %v523 = vand.u32 %v176, 2147483648
  %v524 = vsel %vm522, %v523, %v521
  %v525 = vrsqrt.pop %v179
  %v526 = vmul.f32 %v525, %v179
  %v527 = vmul.f32 %v526, %v525
  %v528 = vmul.f32 0.5, %v527
  %v529 = vsub.f32 1.5, %v528
  %v530 = vmul.f32 %v525, %v529
  %v531 = vmul.f32 %v179, %v530
  %vm532 = vcmp.eq.f32.partialorder %v179, inf
  %v533 = vsel %vm532, %v179, %v531
  %vm534 = vcmp.eq.f32.partialorder %v179, 0.0
  %v535 = vand.u32 %v179, 2147483648
  %v536 = vsel %vm534, %v535, %v533
  %v537 = vrsqrt.pop %v182
  %v538 = vmul.f32 %v537, %v182
  %v539 = vmul.f32 %v538, %v537
  %v540 = vmul.f32 0.5, %v539
  %v541 = vsub.f32 1.5, %v540
  %v542 = vmul.f32 %v537, %v541
  %v543 = vmul.f32 %v182, %v542
  %vm544 = vcmp.eq.f32.partialorder %v182, inf
  %v545 = vsel %vm544, %v182, %v543
  %vm546 = vcmp.eq.f32.partialorder %v182, 0.0
  %v547 = vand.u32 %v182, 2147483648
  %v548 = vsel %vm546, %v547, %v545
  %v549 = vrsqrt.pop %v185
  %v550 = vmul.f32 %v549, %v185
  %v551 = vmul.f32 %v550, %v549
  %v552 = vmul.f32 0.5, %v551
  %v553 = vsub.f32 1.5, %v552
  %v554 = vmul.f32 %v549, %v553
  %v555 = vmul.f32 %v185, %v554
  %vm556 = vcmp.eq.f32.partialorder %v185, inf
  %v557 = vsel %vm556, %v185, %v555
  %vm558 = vcmp.eq.f32.partialorder %v185, 0.0
  %v559 = vand.u32 %v185, 2147483648
  %v560 = vsel %vm558, %v559, %v557
  %v561 = vrsqrt.pop %v188
  %v562 = vmul.f32 %v561, %v188
  %v563 = vmul.f32 %v562, %v561
  %v564 = vmul.f32 0.5, %v563
  %v565 = vsub.f32 1.5, %v564
  %v566 = vmul.f32 %v561, %v565
  %v567 = vmul.f32 %v188, %v566
  %vm568 = vcmp.eq.f32.partialorder %v188, inf
  %v569 = vsel %vm568, %v188, %v567
  %vm570 = vcmp.eq.f32.partialorder %v188, 0.0
  %v571 = vand.u32 %v188, 2147483648
  %v572 = vsel %vm570, %v571, %v569
  %v573 = vpack.c.bf16 %v29, %v28
  %v574 = vpack.c.bf16 %v31, %v30
  %v575 = vpack.c.bf16 %v33, %v32
  %v576 = vpack.c.bf16 %v35, %v34
  %v577 = vpack.c.bf16 %v37, %v36
  %v578 = vpack.c.bf16 %v39, %v38
  %v579 = vpack.c.bf16 %v41, %v40
  %v580 = vpack.c.bf16 %v43, %v42
  %v581 = vpack.c.bf16 %v45, %v44
  %v582 = vpack.c.bf16 %v47, %v46
  %v583 = vpack.c.bf16 %v49, %v48
  %v584 = vpack.c.bf16 %v51, %v50
  %v585 = vpack.c.bf16 %v53, %v52
  %v586 = vpack.c.bf16 %v55, %v54
  %v587 = vpack.c.bf16 %v57, %v56
  %v588 = vpack.c.bf16 %v59, %v58
  %v589 = vld [vmem:[%s1] sm:$0xff]
  %v590 = vld [vmem:[%s1 + $0x8] sm:$0xff]
  %v591 = vld [vmem:[%s1 + $0x10] sm:$0xff]
  %v592 = vld [vmem:[%s1 + $0x18] sm:$0xff]
  %v593 = vld [vmem:[%s1 + $0x20] sm:$0xff]
  %v594 = vld [vmem:[%s1 + $0x28] sm:$0xff]
  %v595 = vld [vmem:[%s1 + $0x30] sm:$0xff]
  %v596 = vld [vmem:[%s1 + $0x38] sm:$0xff]
  %v597 = vld [vmem:[%s1 + $0x40] sm:$0xff]
  %v598 = vld [vmem:[%s1 + $0x48] sm:$0xff]
  %v599 = vld [vmem:[%s1 + $0x50] sm:$0xff]
  %v600 = vld [vmem:[%s1 + $0x58] sm:$0xff]
  %v601 = vld [vmem:[%s1 + $0x60] sm:$0xff]
  %v602 = vld [vmem:[%s1 + $0x68] sm:$0xff]
  %v603 = vld [vmem:[%s1 + $0x70] sm:$0xff]
  %v604 = vld [vmem:[%s1 + $0x78] sm:$0xff]
  %v605 = vld [vmem:[%s2] sm:$0xf]
  %v607 = vperm.slane %v605, 0
  %v608 = vperm.slane %v605, 1
  %v609 = vperm.slane %v605, 2
  %v610 = vperm.slane %v605, 3
  %v631 = vunpack.c.l.b16 %v589
  %v632 = vunpack.c.h.b16 %v589
  %v633 = vunpack.c.l.b16 %v590
  %v634 = vunpack.c.h.b16 %v590
  %v635 = vunpack.c.l.b16 %v591
  %v636 = vunpack.c.h.b16 %v591
  %v637 = vunpack.c.l.b16 %v592
  %v638 = vunpack.c.h.b16 %v592
  %v639 = vunpack.c.l.b16 %v593
  %v640 = vunpack.c.h.b16 %v593
  %v641 = vunpack.c.l.b16 %v594
  %v642 = vunpack.c.h.b16 %v594
  %v643 = vunpack.c.l.b16 %v595
  %v644 = vunpack.c.h.b16 %v595
  %v645 = vunpack.c.l.b16 %v596
  %v646 = vunpack.c.h.b16 %v596
  %v647 = vunpack.c.l.b16 %v597
  %v648 = vunpack.c.h.b16 %v597
  %v649 = vunpack.c.l.b16 %v598
  %v650 = vunpack.c.h.b16 %v598
  %v651 = vunpack.c.l.b16 %v599
  %v652 = vunpack.c.h.b16 %v599
  %v653 = vunpack.c.l.b16 %v600
  %v654 = vunpack.c.h.b16 %v600
  %v655 = vunpack.c.l.b16 %v601
  %v656 = vunpack.c.h.b16 %v601
  %v657 = vunpack.c.l.b16 %v602
  %v658 = vunpack.c.h.b16 %v602
  %v659 = vunpack.c.l.b16 %v603
  %v660 = vunpack.c.h.b16 %v603
  %v661 = vunpack.c.l.b16 %v604
  %v662 = vunpack.c.h.b16 %v604
  %v663 = vpack.c.b16 %v635, %v631
  %v664 = vpack.c.b16 %v636, %v632
  %v665 = vpack.c.b16 %v637, %v633
  %v666 = vpack.c.b16 %v638, %v634
  %v667 = vpack.c.b16 %v643, %v639
  %v668 = vpack.c.b16 %v644, %v640
  %v669 = vpack.c.b16 %v645, %v641
  %v670 = vpack.c.b16 %v646, %v642
  %v671 = vpack.c.b16 %v651, %v647
  %v672 = vpack.c.b16 %v652, %v648
  %v673 = vpack.c.b16 %v653, %v649
  %v674 = vpack.c.b16 %v654, %v650
  %v675 = vpack.c.b16 %v659, %v655
  %v676 = vpack.c.b16 %v660, %v656
  %v677 = vpack.c.b16 %v661, %v657
  %v678 = vpack.c.b16 %v662, %v658
  %v696 = vsel %vm92, %v573, 0
  %v699 = vsel %vm92, %v574, 0
  %v702 = vsel %vm92, %v575, 0
  %v705 = vsel %vm92, %v576, 0
  %v708 = vsel %vm92, %v577, 0
  %v711 = vsel %vm92, %v578, 0
  %v714 = vsel %vm92, %v579, 0
  %v717 = vsel %vm92, %v580, 0
  %v720 = vsel %vm92, %v581, 0
  %v723 = vsel %vm92, %v582, 0
  %v726 = vsel %vm92, %v583, 0
  %v729 = vsel %vm92, %v584, 0
  %v732 = vsel %vm92, %v585, 0
  %v735 = vsel %vm92, %v586, 0
  %v738 = vsel %vm92, %v587, 0
  %v741 = vsel %vm92, %v588, 0
  %743 = vmatpush.bf16.msra.mxu0 0
  %744 = vmatpush.bf16.msra.mxu0 0
  %745 = vmatpush.bf16.msra.mxu0 0
  %746 = vmatpush.bf16.msra.mxu0 0
  %747 = vmatpush.bf16.msra.mxu0 %v675
  %748 = vmatpush.bf16.msra.mxu0 %v671
  %749 = vmatpush.bf16.msra.mxu0 %v667
  %750 = vmatpush.bf16.msra.mxu0 %v663
  %751 = vmatmul.bf16.gmra.mxu0 %v696
  %v752 = vpop.f32.mrf.mxu0
  %v753 = vadd.f32 %v607, %v752
  %v754 = vpop.f32.mrf.mxu0
  %v755 = vadd.f32 %v607, %v754
  %756 = vmatmul.bf16.gmra.mxu0 %v699
  %v757 = vpop.f32.mrf.mxu0
  %v758 = vadd.f32 %v607, %v757
  %v759 = vpop.f32.mrf.mxu0
  %v760 = vadd.f32 %v607, %v759
  %761 = vmatmul.bf16.gmra.mxu0 %v702
  %v762 = vpop.f32.mrf.mxu0
  %v763 = vadd.f32 %v607, %v762
  %v764 = vpop.f32.mrf.mxu0
  %v765 = vadd.f32 %v607, %v764
  %766 = vmatmul.bf16.gmra.mxu0 %v705
  %v767 = vpop.f32.mrf.mxu0
  %v768 = vadd.f32 %v607, %v767
  %v769 = vpop.f32.mrf.mxu0
  %v770 = vadd.f32 %v607, %v769
  %771 = vmatmul.bf16.gmra.mxu0 %v708
  %v772 = vpop.f32.mrf.mxu0
  %v773 = vadd.f32 %v607, %v772
  %v774 = vpop.f32.mrf.mxu0
  %v775 = vadd.f32 %v607, %v774
  %776 = vmatmul.bf16.gmra.mxu0 %v711
  %v777 = vpop.f32.mrf.mxu0
  %v778 = vadd.f32 %v607, %v777
  %v779 = vpop.f32.mrf.mxu0
  %v780 = vadd.f32 %v607, %v779
  %781 = vmatmul.bf16.gmra.mxu0 %v714
  %v782 = vpop.f32.mrf.mxu0
  %v783 = vadd.f32 %v607, %v782
  %v784 = vpop.f32.mrf.mxu0
  %v785 = vadd.f32 %v607, %v784
  %786 = vmatmul.bf16.gmra.mxu0 %v717
  %v787 = vpop.f32.mrf.mxu0
  %v788 = vadd.f32 %v607, %v787
  %v789 = vpop.f32.mrf.mxu0
  %v790 = vadd.f32 %v607, %v789
  %791 = vmatmul.bf16.gmra.mxu0 %v720
  %v792 = vpop.f32.mrf.mxu0
  %v793 = vadd.f32 %v607, %v792
  %v794 = vpop.f32.mrf.mxu0
  %v795 = vadd.f32 %v607, %v794
  %796 = vmatmul.bf16.gmra.mxu0 %v723
  %v797 = vpop.f32.mrf.mxu0
  %v798 = vadd.f32 %v607, %v797
  %v799 = vpop.f32.mrf.mxu0
  %v800 = vadd.f32 %v607, %v799
  %801 = vmatmul.bf16.gmra.mxu0 %v726
  %v802 = vpop.f32.mrf.mxu0
  %v803 = vadd.f32 %v607, %v802
  %v804 = vpop.f32.mrf.mxu0
  %v805 = vadd.f32 %v607, %v804
  %806 = vmatmul.bf16.gmra.mxu0 %v729
  %v807 = vpop.f32.mrf.mxu0
  %v808 = vadd.f32 %v607, %v807
  %v809 = vpop.f32.mrf.mxu0
  %v810 = vadd.f32 %v607, %v809
  %811 = vmatmul.bf16.gmra.mxu0 %v732
  %v812 = vpop.f32.mrf.mxu0
  %v813 = vadd.f32 %v607, %v812
  %v814 = vpop.f32.mrf.mxu0
  %v815 = vadd.f32 %v607, %v814
  %816 = vmatmul.bf16.gmra.mxu0 %v735
  %v817 = vpop.f32.mrf.mxu0
  %v818 = vadd.f32 %v607, %v817
  %v819 = vpop.f32.mrf.mxu0
  %v820 = vadd.f32 %v607, %v819
  %821 = vmatmul.bf16.gmra.mxu0 %v738
  %v822 = vpop.f32.mrf.mxu0
  %v823 = vadd.f32 %v607, %v822
  %v824 = vpop.f32.mrf.mxu0
  %v825 = vadd.f32 %v607, %v824
  %826 = vmatmul.bf16.gmra.mxu0 %v741
  %v827 = vpop.f32.mrf.mxu0
  %v828 = vadd.f32 %v607, %v827
  %v829 = vpop.f32.mrf.mxu0
  %v830 = vadd.f32 %v607, %v829
  %831 = vdwg.mxu0
  %832 = vmatpush.bf16.msra.mxu0 0
  %833 = vmatpush.bf16.msra.mxu0 0
  %834 = vmatpush.bf16.msra.mxu0 0
  %835 = vmatpush.bf16.msra.mxu0 0
  %836 = vmatpush.bf16.msra.mxu0 %v676
  %837 = vmatpush.bf16.msra.mxu0 %v672
  %838 = vmatpush.bf16.msra.mxu0 %v668
  %839 = vmatpush.bf16.msra.mxu0 %v664
  %840 = vmatmul.bf16.gmra.mxu0 %v696
  %v841 = vpop.f32.mrf.mxu0
  %v842 = vadd.f32 %v608, %v841
  %v843 = vpop.f32.mrf.mxu0
  %v844 = vadd.f32 %v608, %v843
  %845 = vmatmul.bf16.gmra.mxu0 %v699
  %v846 = vpop.f32.mrf.mxu0
  %v847 = vadd.f32 %v608, %v846
  %v848 = vpop.f32.mrf.mxu0
  %v849 = vadd.f32 %v608, %v848
  %850 = vmatmul.bf16.gmra.mxu0 %v702
  %v851 = vpop.f32.mrf.mxu0
  %v852 = vadd.f32 %v608, %v851
  %v853 = vpop.f32.mrf.mxu0
  %v854 = vadd.f32 %v608, %v853
  %855 = vmatmul.bf16.gmra.mxu0 %v705
  %v856 = vpop.f32.mrf.mxu0
  %v857 = vadd.f32 %v608, %v856
  %v858 = vpop.f32.mrf.mxu0
  %v859 = vadd.f32 %v608, %v858
  %860 = vmatmul.bf16.gmra.mxu0 %v708
  %v861 = vpop.f32.mrf.mxu0
  %v862 = vadd.f32 %v608, %v861
  %v863 = vpop.f32.mrf.mxu0
  %v864 = vadd.f32 %v608, %v863
  %865 = vmatmul.bf16.gmra.mxu0 %v711
  %v866 = vpop.f32.mrf.mxu0
  %v867 = vadd.f32 %v608, %v866
  %v868 = vpop.f32.mrf.mxu0
  %v869 = vadd.f32 %v608, %v868
  %870 = vmatmul.bf16.gmra.mxu0 %v714
  %v871 = vpop.f32.mrf.mxu0
  %v872 = vadd.f32 %v608, %v871
  %v873 = vpop.f32.mrf.mxu0
  %v874 = vadd.f32 %v608, %v873
  %875 = vmatmul.bf16.gmra.mxu0 %v717
  %v876 = vpop.f32.mrf.mxu0
  %v877 = vadd.f32 %v608, %v876
  %v878 = vpop.f32.mrf.mxu0
  %v879 = vadd.f32 %v608, %v878
  %880 = vmatmul.bf16.gmra.mxu0 %v720
  %v881 = vpop.f32.mrf.mxu0
  %v882 = vadd.f32 %v608, %v881
  %v883 = vpop.f32.mrf.mxu0
  %v884 = vadd.f32 %v608, %v883
  %885 = vmatmul.bf16.gmra.mxu0 %v723
  %v886 = vpop.f32.mrf.mxu0
  %v887 = vadd.f32 %v608, %v886
  %v888 = vpop.f32.mrf.mxu0
  %v889 = vadd.f32 %v608, %v888
  %890 = vmatmul.bf16.gmra.mxu0 %v726
  %v891 = vpop.f32.mrf.mxu0
  %v892 = vadd.f32 %v608, %v891
  %v893 = vpop.f32.mrf.mxu0
  %v894 = vadd.f32 %v608, %v893
  %895 = vmatmul.bf16.gmra.mxu0 %v729
  %v896 = vpop.f32.mrf.mxu0
  %v897 = vadd.f32 %v608, %v896
  %v898 = vpop.f32.mrf.mxu0
  %v899 = vadd.f32 %v608, %v898
  %900 = vmatmul.bf16.gmra.mxu0 %v732
  %v901 = vpop.f32.mrf.mxu0
  %v902 = vadd.f32 %v608, %v901
  %v903 = vpop.f32.mrf.mxu0
  %v904 = vadd.f32 %v608, %v903
  %905 = vmatmul.bf16.gmra.mxu0 %v735
  %v906 = vpop.f32.mrf.mxu0
  %v907 = vadd.f32 %v608, %v906
  %v908 = vpop.f32.mrf.mxu0
  %v909 = vadd.f32 %v608, %v908
  %910 = vmatmul.bf16.gmra.mxu0 %v738
  %v911 = vpop.f32.mrf.mxu0
  %v912 = vadd.f32 %v608, %v911
  %v913 = vpop.f32.mrf.mxu0
  %v914 = vadd.f32 %v608, %v913
  %915 = vmatmul.bf16.gmra.mxu0 %v741
  %v916 = vpop.f32.mrf.mxu0
  %v917 = vadd.f32 %v608, %v916
  %v918 = vpop.f32.mrf.mxu0
  %v919 = vadd.f32 %v608, %v918
  %920 = vdwg.mxu0
  %921 = vmatpush.bf16.msra.mxu0 0
  %922 = vmatpush.bf16.msra.mxu0 0
  %923 = vmatpush.bf16.msra.mxu0 0
  %924 = vmatpush.bf16.msra.mxu0 0
  %925 = vmatpush.bf16.msra.mxu0 %v677
  %926 = vmatpush.bf16.msra.mxu0 %v673
  %927 = vmatpush.bf16.msra.mxu0 %v669
  %928 = vmatpush.bf16.msra.mxu0 %v665
  %929 = vmatmul.bf16.gmra.mxu0 %v696
  %v930 = vpop.f32.mrf.mxu0
  %v931 = vadd.f32 %v609, %v930
  %v932 = vpop.f32.mrf.mxu0
  %v933 = vadd.f32 %v609, %v932
  %934 = vmatmul.bf16.gmra.mxu0 %v699
  %v935 = vpop.f32.mrf.mxu0
  %v936 = vadd.f32 %v609, %v935
  %v937 = vpop.f32.mrf.mxu0
  %v938 = vadd.f32 %v609, %v937
  %939 = vmatmul.bf16.gmra.mxu0 %v702
  %v940 = vpop.f32.mrf.mxu0
  %v941 = vadd.f32 %v609, %v940
  %v942 = vpop.f32.mrf.mxu0
  %v943 = vadd.f32 %v609, %v942
  %944 = vmatmul.bf16.gmra.mxu0 %v705
  %v945 = vpop.f32.mrf.mxu0
  %v946 = vadd.f32 %v609, %v945
  %v947 = vpop.f32.mrf.mxu0
  %v948 = vadd.f32 %v609, %v947
  %949 = vmatmul.bf16.gmra.mxu0 %v708
  %v950 = vpop.f32.mrf.mxu0
  %v951 = vadd.f32 %v609, %v950
  %v952 = vpop.f32.mrf.mxu0
  %v953 = vadd.f32 %v609, %v952
  %954 = vmatmul.bf16.gmra.mxu0 %v711
  %v955 = vpop.f32.mrf.mxu0
  %v956 = vadd.f32 %v609, %v955
  %v957 = vpop.f32.mrf.mxu0
  %v958 = vadd.f32 %v609, %v957
  %959 = vmatmul.bf16.gmra.mxu0 %v714
  %v960 = vpop.f32.mrf.mxu0
  %v961 = vadd.f32 %v609, %v960
  %v962 = vpop.f32.mrf.mxu0
  %v963 = vadd.f32 %v609, %v962
  %964 = vmatmul.bf16.gmra.mxu0 %v717
  %v965 = vpop.f32.mrf.mxu0
  %v966 = vadd.f32 %v609, %v965
  %v967 = vpop.f32.mrf.mxu0
  %v968 = vadd.f32 %v609, %v967
  %969 = vmatmul.bf16.gmra.mxu0 %v720
  %v970 = vpop.f32.mrf.mxu0
  %v971 = vadd.f32 %v609, %v970
  %v972 = vpop.f32.mrf.mxu0
  %v973 = vadd.f32 %v609, %v972
  %974 = vmatmul.bf16.gmra.mxu0 %v723
  %v975 = vpop.f32.mrf.mxu0
  %v976 = vadd.f32 %v609, %v975
  %v977 = vpop.f32.mrf.mxu0
  %v978 = vadd.f32 %v609, %v977
  %979 = vmatmul.bf16.gmra.mxu0 %v726
  %v980 = vpop.f32.mrf.mxu0
  %v981 = vadd.f32 %v609, %v980
  %v982 = vpop.f32.mrf.mxu0
  %v983 = vadd.f32 %v609, %v982
  %984 = vmatmul.bf16.gmra.mxu0 %v729
  %v985 = vpop.f32.mrf.mxu0
  %v986 = vadd.f32 %v609, %v985
  %v987 = vpop.f32.mrf.mxu0
  %v988 = vadd.f32 %v609, %v987
  %989 = vmatmul.bf16.gmra.mxu0 %v732
  %v990 = vpop.f32.mrf.mxu0
  %v991 = vadd.f32 %v609, %v990
  %v992 = vpop.f32.mrf.mxu0
  %v993 = vadd.f32 %v609, %v992
  %994 = vmatmul.bf16.gmra.mxu0 %v735
  %v995 = vpop.f32.mrf.mxu0
  %v996 = vadd.f32 %v609, %v995
  %v997 = vpop.f32.mrf.mxu0
  %v998 = vadd.f32 %v609, %v997
  %999 = vmatmul.bf16.gmra.mxu0 %v738
  %v1000 = vpop.f32.mrf.mxu0
  %v1001 = vadd.f32 %v609, %v1000
  %v1002 = vpop.f32.mrf.mxu0
  %v1003 = vadd.f32 %v609, %v1002
  %1004 = vmatmul.bf16.gmra.mxu0 %v741
  %v1005 = vpop.f32.mrf.mxu0
  %v1006 = vadd.f32 %v609, %v1005
  %v1007 = vpop.f32.mrf.mxu0
  %v1008 = vadd.f32 %v609, %v1007
  %1009 = vdwg.mxu0
  %1010 = vmatpush.bf16.msra.mxu0 0
  %1011 = vmatpush.bf16.msra.mxu0 0
  %1012 = vmatpush.bf16.msra.mxu0 0
  %1013 = vmatpush.bf16.msra.mxu0 0
  %1014 = vmatpush.bf16.msra.mxu0 %v678
  %1015 = vmatpush.bf16.msra.mxu0 %v674
  %1016 = vmatpush.bf16.msra.mxu0 %v670
  %1017 = vmatpush.bf16.msra.mxu0 %v666
  %1018 = vmatmul.bf16.gmra.mxu0 %v696
  %v1019 = vpop.f32.mrf.mxu0
  %v1020 = vadd.f32 %v610, %v1019
  %v1021 = vpop.f32.mrf.mxu0
  %v1022 = vadd.f32 %v610, %v1021
  %1023 = vmatmul.bf16.gmra.mxu0 %v699
  %v1024 = vpop.f32.mrf.mxu0
  %v1025 = vadd.f32 %v610, %v1024
  %v1026 = vpop.f32.mrf.mxu0
  %v1027 = vadd.f32 %v610, %v1026
  %1028 = vmatmul.bf16.gmra.mxu0 %v702
  %v1029 = vpop.f32.mrf.mxu0
  %v1030 = vadd.f32 %v610, %v1029
  %v1031 = vpop.f32.mrf.mxu0
  %v1032 = vadd.f32 %v610, %v1031
  %1033 = vmatmul.bf16.gmra.mxu0 %v705
  %v1034 = vpop.f32.mrf.mxu0
  %v1035 = vadd.f32 %v610, %v1034
  %v1036 = vpop.f32.mrf.mxu0
  %v1037 = vadd.f32 %v610, %v1036
  %1038 = vmatmul.bf16.gmra.mxu0 %v708
  %v1039 = vpop.f32.mrf.mxu0
  %v1040 = vadd.f32 %v610, %v1039
  %v1041 = vpop.f32.mrf.mxu0
  %v1042 = vadd.f32 %v610, %v1041
  %1043 = vmatmul.bf16.gmra.mxu0 %v711
  %v1044 = vpop.f32.mrf.mxu0
  %v1045 = vadd.f32 %v610, %v1044
  %v1046 = vpop.f32.mrf.mxu0
  %v1047 = vadd.f32 %v610, %v1046
  %1048 = vmatmul.bf16.gmra.mxu0 %v714
  %v1049 = vpop.f32.mrf.mxu0
  %v1050 = vadd.f32 %v610, %v1049
  %v1051 = vpop.f32.mrf.mxu0
  %v1052 = vadd.f32 %v610, %v1051
  %1053 = vmatmul.bf16.gmra.mxu0 %v717
  %v1054 = vpop.f32.mrf.mxu0
  %v1055 = vadd.f32 %v610, %v1054
  %v1056 = vpop.f32.mrf.mxu0
  %v1057 = vadd.f32 %v610, %v1056
  %1058 = vmatmul.bf16.gmra.mxu0 %v720
  %v1059 = vpop.f32.mrf.mxu0
  %v1060 = vadd.f32 %v610, %v1059
  %v1061 = vpop.f32.mrf.mxu0
  %v1062 = vadd.f32 %v610, %v1061
  %1063 = vmatmul.bf16.gmra.mxu0 %v723
  %v1064 = vpop.f32.mrf.mxu0
  %v1065 = vadd.f32 %v610, %v1064
  %v1066 = vpop.f32.mrf.mxu0
  %v1067 = vadd.f32 %v610, %v1066
  %1068 = vmatmul.bf16.gmra.mxu0 %v726
  %v1069 = vpop.f32.mrf.mxu0
  %v1070 = vadd.f32 %v610, %v1069
  %v1071 = vpop.f32.mrf.mxu0
  %v1072 = vadd.f32 %v610, %v1071
  %1073 = vmatmul.bf16.gmra.mxu0 %v729
  %v1074 = vpop.f32.mrf.mxu0
  %v1075 = vadd.f32 %v610, %v1074
  %v1076 = vpop.f32.mrf.mxu0
  %v1077 = vadd.f32 %v610, %v1076
  %1078 = vmatmul.bf16.gmra.mxu0 %v732
  %v1079 = vpop.f32.mrf.mxu0
  %v1080 = vadd.f32 %v610, %v1079
  %v1081 = vpop.f32.mrf.mxu0
  %v1082 = vadd.f32 %v610, %v1081
  %1083 = vmatmul.bf16.gmra.mxu0 %v735
  %v1084 = vpop.f32.mrf.mxu0
  %v1085 = vadd.f32 %v610, %v1084
  %v1086 = vpop.f32.mrf.mxu0
  %v1087 = vadd.f32 %v610, %v1086
  %1088 = vmatmul.bf16.gmra.mxu0 %v738
  %v1089 = vpop.f32.mrf.mxu0
  %v1090 = vadd.f32 %v610, %v1089
  %v1091 = vpop.f32.mrf.mxu0
  %v1092 = vadd.f32 %v610, %v1091
  %1093 = vmatmul.bf16.gmra.mxu0 %v741
  %v1094 = vpop.f32.mrf.mxu0
  %v1095 = vadd.f32 %v610, %v1094
  %v1096 = vpop.f32.mrf.mxu0
  %v1097 = vadd.f32 %v610, %v1096
  %1098 = vdwg.mxu0
  %v1099 = vmax.f32 %v753, 0.0
  %v1100 = vmax.f32 %v842, 0.0
  %v1101 = vmax.f32 %v931, 0.0
  %v1102 = vmax.f32 %v1020, 0.0
  %v1103 = vmax.f32 %v755, 0.0
  %v1104 = vmax.f32 %v844, 0.0
  %v1105 = vmax.f32 %v933, 0.0
  %v1106 = vmax.f32 %v1022, 0.0
  %v1107 = vmax.f32 %v758, 0.0
  %v1108 = vmax.f32 %v847, 0.0
  %v1109 = vmax.f32 %v936, 0.0
  %v1110 = vmax.f32 %v1025, 0.0
  %v1111 = vmax.f32 %v760, 0.0
  %v1112 = vmax.f32 %v849, 0.0
  %v1113 = vmax.f32 %v938, 0.0
  %v1114 = vmax.f32 %v1027, 0.0
  %v1115 = vmax.f32 %v763, 0.0
  %v1116 = vmax.f32 %v852, 0.0
  %v1117 = vmax.f32 %v941, 0.0
  %v1118 = vmax.f32 %v1030, 0.0
  %v1119 = vmax.f32 %v765, 0.0
  %v1120 = vmax.f32 %v854, 0.0
  %v1121 = vmax.f32 %v943, 0.0
  %v1122 = vmax.f32 %v1032, 0.0
  %v1123 = vmax.f32 %v768, 0.0
  %v1124 = vmax.f32 %v857, 0.0
  %v1125 = vmax.f32 %v946, 0.0
  %v1126 = vmax.f32 %v1035, 0.0
  %v1127 = vmax.f32 %v770, 0.0
  %v1128 = vmax.f32 %v859, 0.0
  %v1129 = vmax.f32 %v948, 0.0
  %v1130 = vmax.f32 %v1037, 0.0
  %v1131 = vmax.f32 %v773, 0.0
  %v1132 = vmax.f32 %v862, 0.0
  %v1133 = vmax.f32 %v951, 0.0
  %v1134 = vmax.f32 %v1040, 0.0
  %v1135 = vmax.f32 %v775, 0.0
  %v1136 = vmax.f32 %v864, 0.0
  %v1137 = vmax.f32 %v953, 0.0
  %v1138 = vmax.f32 %v1042, 0.0
  %v1139 = vmax.f32 %v778, 0.0
  %v1140 = vmax.f32 %v867, 0.0
  %v1141 = vmax.f32 %v956, 0.0
  %v1142 = vmax.f32 %v1045, 0.0
  %v1143 = vmax.f32 %v780, 0.0
  %v1144 = vmax.f32 %v869, 0.0
  %v1145 = vmax.f32 %v958, 0.0
  %v1146 = vmax.f32 %v1047, 0.0
  %v1147 = vmax.f32 %v783, 0.0
  %v1148 = vmax.f32 %v872, 0.0
  %v1149 = vmax.f32 %v961, 0.0
  %v1150 = vmax.f32 %v1050, 0.0
  %v1151 = vmax.f32 %v785, 0.0
  %v1152 = vmax.f32 %v874, 0.0
  %v1153 = vmax.f32 %v963, 0.0
  %v1154 = vmax.f32 %v1052, 0.0
  %v1155 = vmax.f32 %v788, 0.0
  %v1156 = vmax.f32 %v877, 0.0
  %v1157 = vmax.f32 %v966, 0.0
  %v1158 = vmax.f32 %v1055, 0.0
  %v1159 = vmax.f32 %v790, 0.0
  %v1160 = vmax.f32 %v879, 0.0
  %v1161 = vmax.f32 %v968, 0.0
  %v1162 = vmax.f32 %v1057, 0.0
  %v1163 = vmax.f32 %v793, 0.0
  %v1164 = vmax.f32 %v882, 0.0
  %v1165 = vmax.f32 %v971, 0.0
  %v1166 = vmax.f32 %v1060, 0.0
  %v1167 = vmax.f32 %v795, 0.0
  %v1168 = vmax.f32 %v884, 0.0
  %v1169 = vmax.f32 %v973, 0.0
  %v1170 = vmax.f32 %v1062, 0.0
  %v1171 = vmax.f32 %v798, 0.0
  %v1172 = vmax.f32 %v887, 0.0
  %v1173 = vmax.f32 %v976, 0.0
  %v1174 = vmax.f32 %v1065, 0.0
  %v1175 = vmax.f32 %v800, 0.0
  %v1176 = vmax.f32 %v889, 0.0
  %v1177 = vmax.f32 %v978, 0.0
  %v1178 = vmax.f32 %v1067, 0.0
  %v1179 = vmax.f32 %v803, 0.0
  %v1180 = vmax.f32 %v892, 0.0
  %v1181 = vmax.f32 %v981, 0.0
  %v1182 = vmax.f32 %v1070, 0.0
  %v1183 = vmax.f32 %v805, 0.0
  %v1184 = vmax.f32 %v894, 0.0
  %v1185 = vmax.f32 %v983, 0.0
  %v1186 = vmax.f32 %v1072, 0.0
  %v1187 = vmax.f32 %v808, 0.0
  %v1188 = vmax.f32 %v897, 0.0
  %v1189 = vmax.f32 %v986, 0.0
  %v1190 = vmax.f32 %v1075, 0.0
  %v1191 = vmax.f32 %v810, 0.0
  %v1192 = vmax.f32 %v899, 0.0
  %v1193 = vmax.f32 %v988, 0.0
  %v1194 = vmax.f32 %v1077, 0.0
  %v1195 = vmax.f32 %v813, 0.0
  %v1196 = vmax.f32 %v902, 0.0
  %v1197 = vmax.f32 %v991, 0.0
  %v1198 = vmax.f32 %v1080, 0.0
  %v1199 = vmax.f32 %v815, 0.0
  %v1200 = vmax.f32 %v904, 0.0
  %v1201 = vmax.f32 %v993, 0.0
  %v1202 = vmax.f32 %v1082, 0.0
  %v1203 = vmax.f32 %v818, 0.0
  %v1204 = vmax.f32 %v907, 0.0
  %v1205 = vmax.f32 %v996, 0.0
  %v1206 = vmax.f32 %v1085, 0.0
  %v1207 = vmax.f32 %v820, 0.0
  %v1208 = vmax.f32 %v909, 0.0
  %v1209 = vmax.f32 %v998, 0.0
  %v1210 = vmax.f32 %v1087, 0.0
  %v1211 = vmax.f32 %v823, 0.0
  %v1212 = vmax.f32 %v912, 0.0
  %v1213 = vmax.f32 %v1001, 0.0
  %v1214 = vmax.f32 %v1090, 0.0
  %v1215 = vmax.f32 %v825, 0.0
  %v1216 = vmax.f32 %v914, 0.0
  %v1217 = vmax.f32 %v1003, 0.0
  %v1218 = vmax.f32 %v1092, 0.0
  %v1219 = vmax.f32 %v828, 0.0
  %v1220 = vmax.f32 %v917, 0.0
  %v1221 = vmax.f32 %v1006, 0.0
  %v1222 = vmax.f32 %v1095, 0.0
  %v1223 = vmax.f32 %v830, 0.0
  %v1224 = vmax.f32 %v919, 0.0
  %v1225 = vmax.f32 %v1008, 0.0
  %v1226 = vmax.f32 %v1097, 0.0
  %v1227 = vpack.c.bf16 %v1103, %v1099
  %v1228 = vpack.c.bf16 %v1104, %v1100
  %v1229 = vpack.c.bf16 %v1105, %v1101
  %v1230 = vpack.c.bf16 %v1106, %v1102
  %v1231 = vpack.c.bf16 %v1111, %v1107
  %v1232 = vpack.c.bf16 %v1112, %v1108
  %v1233 = vpack.c.bf16 %v1113, %v1109
  %v1234 = vpack.c.bf16 %v1114, %v1110
  %v1235 = vpack.c.bf16 %v1119, %v1115
  %v1236 = vpack.c.bf16 %v1120, %v1116
  %v1237 = vpack.c.bf16 %v1121, %v1117
  %v1238 = vpack.c.bf16 %v1122, %v1118
  %v1239 = vpack.c.bf16 %v1127, %v1123
  %v1240 = vpack.c.bf16 %v1128, %v1124
  %v1241 = vpack.c.bf16 %v1129, %v1125
  %v1242 = vpack.c.bf16 %v1130, %v1126
  %v1243 = vpack.c.bf16 %v1135, %v1131
  %v1244 = vpack.c.bf16 %v1136, %v1132
  %v1245 = vpack.c.bf16 %v1137, %v1133
  %v1246 = vpack.c.bf16 %v1138, %v1134
  %v1247 = vpack.c.bf16 %v1143, %v1139
  %v1248 = vpack.c.bf16 %v1144, %v1140
  %v1249 = vpack.c.bf16 %v1145, %v1141
  %v1250 = vpack.c.bf16 %v1146, %v1142
  %v1251 = vpack.c.bf16 %v1151, %v1147
  %v1252 = vpack.c.bf16 %v1152, %v1148
  %v1253 = vpack.c.bf16 %v1153, %v1149
  %v1254 = vpack.c.bf16 %v1154, %v1150
  %v1255 = vpack.c.bf16 %v1159, %v1155
  %v1256 = vpack.c.bf16 %v1160, %v1156
  %v1257 = vpack.c.bf16 %v1161, %v1157
  %v1258 = vpack.c.bf16 %v1162, %v1158
  %v1259 = vpack.c.bf16 %v1167, %v1163
  %v1260 = vpack.c.bf16 %v1168, %v1164
  %v1261 = vpack.c.bf16 %v1169, %v1165
  %v1262 = vpack.c.bf16 %v1170, %v1166
  %v1263 = vpack.c.bf16 %v1175, %v1171
  %v1264 = vpack.c.bf16 %v1176, %v1172
  %v1265 = vpack.c.bf16 %v1177, %v1173
  %v1266 = vpack.c.bf16 %v1178, %v1174
  %v1267 = vpack.c.bf16 %v1183, %v1179
  %v1268 = vpack.c.bf16 %v1184, %v1180
  %v1269 = vpack.c.bf16 %v1185, %v1181
  %v1270 = vpack.c.bf16 %v1186, %v1182
  %v1271 = vpack.c.bf16 %v1191, %v1187
  %v1272 = vpack.c.bf16 %v1192, %v1188
  %v1273 = vpack.c.bf16 %v1193, %v1189
  %v1274 = vpack.c.bf16 %v1194, %v1190
  %v1275 = vpack.c.bf16 %v1199, %v1195
  %v1276 = vpack.c.bf16 %v1200, %v1196
  %v1277 = vpack.c.bf16 %v1201, %v1197
  %v1278 = vpack.c.bf16 %v1202, %v1198
  %v1279 = vpack.c.bf16 %v1207, %v1203
  %v1280 = vpack.c.bf16 %v1208, %v1204
  %v1281 = vpack.c.bf16 %v1209, %v1205
  %v1282 = vpack.c.bf16 %v1210, %v1206
  %v1283 = vpack.c.bf16 %v1215, %v1211
  %v1284 = vpack.c.bf16 %v1216, %v1212
  %v1285 = vpack.c.bf16 %v1217, %v1213
  %v1286 = vpack.c.bf16 %v1218, %v1214
  %v1287 = vpack.c.bf16 %v1223, %v1219
  %v1288 = vpack.c.bf16 %v1224, %v1220
  %v1289 = vpack.c.bf16 %v1225, %v1221
  %v1290 = vpack.c.bf16 %v1226, %v1222
  %v1291 = vld [vmem:[%s3] sm:$0xf]
  %v1292 = vld [vmem:[%s3 + $0x4] sm:$0xf]
  %v1293 = vld [vmem:[%s3 + $0x8] sm:$0xf]
  %v1294 = vld [vmem:[%s3 + $0xc] sm:$0xf]
  %v1295 = vld [vmem:[%s3 + $0x10] sm:$0xf]
  %v1296 = vld [vmem:[%s3 + $0x14] sm:$0xf]
  %v1297 = vld [vmem:[%s3 + $0x18] sm:$0xf]
  %v1298 = vld [vmem:[%s3 + $0x1c] sm:$0xf]
  %v1299 = vld [vmem:[%s3 + $0x20] sm:$0xf]
  %v1300 = vld [vmem:[%s3 + $0x24] sm:$0xf]
  %v1301 = vld [vmem:[%s3 + $0x28] sm:$0xf]
  %v1302 = vld [vmem:[%s3 + $0x2c] sm:$0xf]
  %v1303 = vld [vmem:[%s3 + $0x30] sm:$0xf]
  %v1304 = vld [vmem:[%s3 + $0x34] sm:$0xf]
  %v1305 = vld [vmem:[%s3 + $0x38] sm:$0xf]
  %v1306 = vld [vmem:[%s3 + $0x3c] sm:$0xf]
  %v1307 = vld [vmem:[%s3 + $0x40] sm:$0xf]
  %v1308 = vld [vmem:[%s3 + $0x44] sm:$0xf]
  %v1309 = vld [vmem:[%s3 + $0x48] sm:$0xf]
  %v1310 = vld [vmem:[%s3 + $0x4c] sm:$0xf]
  %v1311 = vld [vmem:[%s3 + $0x50] sm:$0xf]
  %v1312 = vld [vmem:[%s3 + $0x54] sm:$0xf]
  %v1313 = vld [vmem:[%s3 + $0x58] sm:$0xf]
  %v1314 = vld [vmem:[%s3 + $0x5c] sm:$0xf]
  %v1315 = vld [vmem:[%s3 + $0x60] sm:$0xf]
  %v1316 = vld [vmem:[%s3 + $0x64] sm:$0xf]
  %v1317 = vld [vmem:[%s3 + $0x68] sm:$0xf]
  %v1318 = vld [vmem:[%s3 + $0x6c] sm:$0xf]
  %v1319 = vld [vmem:[%s3 + $0x70] sm:$0xf]
  %v1320 = vld [vmem:[%s3 + $0x74] sm:$0xf]
  %v1321 = vld [vmem:[%s3 + $0x78] sm:$0xf]
  %v1322 = vld [vmem:[%s3 + $0x7c] sm:$0xf]
  %v1323 = vld [vmem:[%s3 + $0x80] sm:$0xf]
  %v1324 = vld [vmem:[%s3 + $0x84] sm:$0xf]
  %v1325 = vld [vmem:[%s3 + $0x88] sm:$0xf]
  %v1326 = vld [vmem:[%s3 + $0x8c] sm:$0xf]
  %v1327 = vld [vmem:[%s3 + $0x90] sm:$0xf]
  %v1328 = vld [vmem:[%s3 + $0x94] sm:$0xf]
  %v1329 = vld [vmem:[%s3 + $0x98] sm:$0xf]
  %v1330 = vld [vmem:[%s3 + $0x9c] sm:$0xf]
  %v1331 = vld [vmem:[%s3 + $0xa0] sm:$0xf]
  %v1332 = vld [vmem:[%s3 + $0xa4] sm:$0xf]
  %v1333 = vld [vmem:[%s3 + $0xa8] sm:$0xf]
  %v1334 = vld [vmem:[%s3 + $0xac] sm:$0xf]
  %v1335 = vld [vmem:[%s3 + $0xb0] sm:$0xf]
  %v1336 = vld [vmem:[%s3 + $0xb4] sm:$0xf]
  %v1337 = vld [vmem:[%s3 + $0xb8] sm:$0xf]
  %v1338 = vld [vmem:[%s3 + $0xbc] sm:$0xf]
  %v1339 = vld [vmem:[%s3 + $0xc0] sm:$0xf]
  %v1340 = vld [vmem:[%s3 + $0xc4] sm:$0xf]
  %v1341 = vld [vmem:[%s3 + $0xc8] sm:$0xf]
  %v1342 = vld [vmem:[%s3 + $0xcc] sm:$0xf]
  %v1343 = vld [vmem:[%s3 + $0xd0] sm:$0xf]
  %v1344 = vld [vmem:[%s3 + $0xd4] sm:$0xf]
  %v1345 = vld [vmem:[%s3 + $0xd8] sm:$0xf]
  %v1346 = vld [vmem:[%s3 + $0xdc] sm:$0xf]
  %v1347 = vld [vmem:[%s3 + $0xe0] sm:$0xf]
  %v1348 = vld [vmem:[%s3 + $0xe4] sm:$0xf]
  %v1349 = vld [vmem:[%s3 + $0xe8] sm:$0xf]
  %v1350 = vld [vmem:[%s3 + $0xec] sm:$0xf]
  %v1351 = vld [vmem:[%s3 + $0xf0] sm:$0xf]
  %v1352 = vld [vmem:[%s3 + $0xf4] sm:$0xf]
  %v1353 = vld [vmem:[%s3 + $0xf8] sm:$0xf]
  %v1354 = vld [vmem:[%s3 + $0xfc] sm:$0xf]
  %v1355 = vld [vmem:[%s4] sm:$0x1]
  %v1357 = vperm.slane %v1355, 0
  %v1423 = vunpack.c.l.b16 %v1291
  %v1424 = vunpack.c.l.b16 %v1292
  %v1425 = vunpack.c.l.b16 %v1293
  %v1426 = vunpack.c.l.b16 %v1294
  %v1427 = vunpack.c.l.b16 %v1295
  %v1428 = vunpack.c.l.b16 %v1296
  %v1429 = vunpack.c.l.b16 %v1297
  %v1430 = vunpack.c.l.b16 %v1298
  %v1431 = vunpack.c.l.b16 %v1299
  %v1432 = vunpack.c.l.b16 %v1300
  %v1433 = vunpack.c.l.b16 %v1301
  %v1434 = vunpack.c.l.b16 %v1302
  %v1435 = vunpack.c.l.b16 %v1303
  %v1436 = vunpack.c.l.b16 %v1304
  %v1437 = vunpack.c.l.b16 %v1305
  %v1438 = vunpack.c.l.b16 %v1306
  %v1439 = vunpack.c.l.b16 %v1307
  %v1440 = vunpack.c.l.b16 %v1308
  %v1441 = vunpack.c.l.b16 %v1309
  %v1442 = vunpack.c.l.b16 %v1310
  %v1443 = vunpack.c.l.b16 %v1311
  %v1444 = vunpack.c.l.b16 %v1312
  %v1445 = vunpack.c.l.b16 %v1313
  %v1446 = vunpack.c.l.b16 %v1314
  %v1447 = vunpack.c.l.b16 %v1315
  %v1448 = vunpack.c.l.b16 %v1316
  %v1449 = vunpack.c.l.b16 %v1317
  %v1450 = vunpack.c.l.b16 %v1318
  %v1451 = vunpack.c.l.b16 %v1319
  %v1452 = vunpack.c.l.b16 %v1320
  %v1453 = vunpack.c.l.b16 %v1321
  %v1454 = vunpack.c.l.b16 %v1322
  %v1455 = vunpack.c.l.b16 %v1323
  %v1456 = vunpack.c.l.b16 %v1324
  %v1457 = vunpack.c.l.b16 %v1325
  %v1458 = vunpack.c.l.b16 %v1326
  %v1459 = vunpack.c.l.b16 %v1327
  %v1460 = vunpack.c.l.b16 %v1328
  %v1461 = vunpack.c.l.b16 %v1329
  %v1462 = vunpack.c.l.b16 %v1330
  %v1463 = vunpack.c.l.b16 %v1331
  %v1464 = vunpack.c.l.b16 %v1332
  %v1465 = vunpack.c.l.b16 %v1333
  %v1466 = vunpack.c.l.b16 %v1334
  %v1467 = vunpack.c.l.b16 %v1335
  %v1468 = vunpack.c.l.b16 %v1336
  %v1469 = vunpack.c.l.b16 %v1337
  %v1470 = vunpack.c.l.b16 %v1338
  %v1471 = vunpack.c.l.b16 %v1339
  %v1472 = vunpack.c.l.b16 %v1340
  %v1473 = vunpack.c.l.b16 %v1341
  %v1474 = vunpack.c.l.b16 %v1342
  %v1475 = vunpack.c.l.b16 %v1343
  %v1476 = vunpack.c.l.b16 %v1344
  %v1477 = vunpack.c.l.b16 %v1345
  %v1478 = vunpack.c.l.b16 %v1346
  %v1479 = vunpack.c.l.b16 %v1347
  %v1480 = vunpack.c.l.b16 %v1348
  %v1481 = vunpack.c.l.b16 %v1349
  %v1482 = vunpack.c.l.b16 %v1350
  %v1483 = vunpack.c.l.b16 %v1351
  %v1484 = vunpack.c.l.b16 %v1352
  %v1485 = vunpack.c.l.b16 %v1353
  %v1486 = vunpack.c.l.b16 %v1354
  %v1487 = vpack.c.b16 %v1424, %v1423
  %v1488 = vpack.c.b16 %v1426, %v1425
  %v1489 = vpack.c.b16 %v1428, %v1427
  %v1490 = vpack.c.b16 %v1430, %v1429
  %v1491 = vpack.c.b16 %v1432, %v1431
  %v1492 = vpack.c.b16 %v1434, %v1433
  %v1493 = vpack.c.b16 %v1436, %v1435
  %v1494 = vpack.c.b16 %v1438, %v1437
  %v1495 = vpack.c.b16 %v1440, %v1439
  %v1496 = vpack.c.b16 %v1442, %v1441
  %v1497 = vpack.c.b16 %v1444, %v1443
  %v1498 = vpack.c.b16 %v1446, %v1445
  %v1499 = vpack.c.b16 %v1448, %v1447
  %v1500 = vpack.c.b16 %v1450, %v1449
  %v1501 = vpack.c.b16 %v1452, %v1451
  %v1502 = vpack.c.b16 %v1454, %v1453
  %v1503 = vpack.c.b16 %v1456, %v1455
  %v1504 = vpack.c.b16 %v1458, %v1457
  %v1505 = vpack.c.b16 %v1460, %v1459
  %v1506 = vpack.c.b16 %v1462, %v1461
  %v1507 = vpack.c.b16 %v1464, %v1463
  %v1508 = vpack.c.b16 %v1466, %v1465
  %v1509 = vpack.c.b16 %v1468, %v1467
  %v1510 = vpack.c.b16 %v1470, %v1469
  %v1511 = vpack.c.b16 %v1472, %v1471
  %v1512 = vpack.c.b16 %v1474, %v1473
  %v1513 = vpack.c.b16 %v1476, %v1475
  %v1514 = vpack.c.b16 %v1478, %v1477
  %v1515 = vpack.c.b16 %v1480, %v1479
  %v1516 = vpack.c.b16 %v1482, %v1481
  %v1517 = vpack.c.b16 %v1484, %v1483
  %v1518 = vpack.c.b16 %v1486, %v1485
  %1551 = vmatpush.bf16.msra.mxu0 %v1494
  %1552 = vmatpush.bf16.msra.mxu0 %v1493
  %1553 = vmatpush.bf16.msra.mxu0 %v1492
  %1554 = vmatpush.bf16.msra.mxu0 %v1491
  %1555 = vmatpush.bf16.msra.mxu0 %v1490
  %1556 = vmatpush.bf16.msra.mxu0 %v1489
  %1557 = vmatpush.bf16.msra.mxu0 %v1488
  %1558 = vmatpush.bf16.msra.mxu0 %v1487
  %1559 = vmatmul.bf16.gmra.mxu0 %v1227
  %v1560 = vpop.f32.mrf.mxu0
  %v1561 = vadd.f32 %v1357, %v1560
  %v1562 = vpop.f32.mrf.mxu0
  %v1563 = vadd.f32 %v1357, %v1562
  %1564 = vmatmul.bf16.gmra.mxu0 %v1231
  %v1565 = vpop.f32.mrf.mxu0
  %v1566 = vadd.f32 %v1357, %v1565
  %v1567 = vpop.f32.mrf.mxu0
  %v1568 = vadd.f32 %v1357, %v1567
  %1569 = vmatmul.bf16.gmra.mxu0 %v1235
  %v1570 = vpop.f32.mrf.mxu0
  %v1571 = vadd.f32 %v1357, %v1570
  %v1572 = vpop.f32.mrf.mxu0
  %v1573 = vadd.f32 %v1357, %v1572
  %1574 = vmatmul.bf16.gmra.mxu0 %v1239
  %v1575 = vpop.f32.mrf.mxu0
  %v1576 = vadd.f32 %v1357, %v1575
  %v1577 = vpop.f32.mrf.mxu0
  %v1578 = vadd.f32 %v1357, %v1577
  %1579 = vmatmul.bf16.gmra.mxu0 %v1243
  %v1580 = vpop.f32.mrf.mxu0
  %v1581 = vadd.f32 %v1357, %v1580
  %v1582 = vpop.f32.mrf.mxu0
  %v1583 = vadd.f32 %v1357, %v1582
  %1584 = vmatmul.bf16.gmra.mxu0 %v1247
  %v1585 = vpop.f32.mrf.mxu0
  %v1586 = vadd.f32 %v1357, %v1585
  %v1587 = vpop.f32.mrf.mxu0
  %v1588 = vadd.f32 %v1357, %v1587
  %1589 = vmatmul.bf16.gmra.mxu0 %v1251
  %v1590 = vpop.f32.mrf.mxu0
  %v1591 = vadd.f32 %v1357, %v1590
  %v1592 = vpop.f32.mrf.mxu0
  %v1593 = vadd.f32 %v1357, %v1592
  %1594 = vmatmul.bf16.gmra.mxu0 %v1255
  %v1595 = vpop.f32.mrf.mxu0
  %v1596 = vadd.f32 %v1357, %v1595
  %v1597 = vpop.f32.mrf.mxu0
  %v1598 = vadd.f32 %v1357, %v1597
  %1599 = vmatmul.bf16.gmra.mxu0 %v1259
  %v1600 = vpop.f32.mrf.mxu0
  %v1601 = vadd.f32 %v1357, %v1600
  %v1602 = vpop.f32.mrf.mxu0
  %v1603 = vadd.f32 %v1357, %v1602
  %1604 = vmatmul.bf16.gmra.mxu0 %v1263
  %v1605 = vpop.f32.mrf.mxu0
  %v1606 = vadd.f32 %v1357, %v1605
  %v1607 = vpop.f32.mrf.mxu0
  %v1608 = vadd.f32 %v1357, %v1607
  %1609 = vmatmul.bf16.gmra.mxu0 %v1267
  %v1610 = vpop.f32.mrf.mxu0
  %v1611 = vadd.f32 %v1357, %v1610
  %v1612 = vpop.f32.mrf.mxu0
  %v1613 = vadd.f32 %v1357, %v1612
  %1614 = vmatmul.bf16.gmra.mxu0 %v1271
  %v1615 = vpop.f32.mrf.mxu0
  %v1616 = vadd.f32 %v1357, %v1615
  %v1617 = vpop.f32.mrf.mxu0
  %v1618 = vadd.f32 %v1357, %v1617
  %1619 = vmatmul.bf16.gmra.mxu0 %v1275
  %v1620 = vpop.f32.mrf.mxu0
  %v1621 = vadd.f32 %v1357, %v1620
  %v1622 = vpop.f32.mrf.mxu0
  %v1623 = vadd.f32 %v1357, %v1622
  %1624 = vmatmul.bf16.gmra.mxu0 %v1279
  %v1625 = vpop.f32.mrf.mxu0
  %v1626 = vadd.f32 %v1357, %v1625
  %v1627 = vpop.f32.mrf.mxu0
  %v1628 = vadd.f32 %v1357, %v1627
  %1629 = vmatmul.bf16.gmra.mxu0 %v1283
  %v1630 = vpop.f32.mrf.mxu0
  %v1631 = vadd.f32 %v1357, %v1630
  %v1632 = vpop.f32.mrf.mxu0
  %v1633 = vadd.f32 %v1357, %v1632
  %1634 = vmatmul.bf16.gmra.mxu0 %v1287
  %v1635 = vpop.f32.mrf.mxu0
  %v1636 = vadd.f32 %v1357, %v1635
  %v1637 = vpop.f32.mrf.mxu0
  %v1638 = vadd.f32 %v1357, %v1637
  %1639 = vdwg.mxu0
  %1640 = vmatpush.bf16.msra.mxu0 %v1502
  %1641 = vmatpush.bf16.msra.mxu0 %v1501
  %1642 = vmatpush.bf16.msra.mxu0 %v1500
  %1643 = vmatpush.bf16.msra.mxu0 %v1499
  %1644 = vmatpush.bf16.msra.mxu0 %v1498
  %1645 = vmatpush.bf16.msra.mxu0 %v1497
  %1646 = vmatpush.bf16.msra.mxu0 %v1496
  %1647 = vmatpush.bf16.msra.mxu0 %v1495
  %1648 = vmatmul.bf16.gmra.mxu0 %v1228
  %v1649 = vpop.f32.mrf.mxu0
  %v1650 = vadd.f32 %v1561, %v1649
  %v1651 = vpop.f32.mrf.mxu0
  %v1652 = vadd.f32 %v1563, %v1651
  %1653 = vmatmul.bf16.gmra.mxu0 %v1232
  %v1654 = vpop.f32.mrf.mxu0
  %v1655 = vadd.f32 %v1566, %v1654
  %v1656 = vpop.f32.mrf.mxu0
  %v1657 = vadd.f32 %v1568, %v1656
  %1658 = vmatmul.bf16.gmra.mxu0 %v1236
  %v1659 = vpop.f32.mrf.mxu0
  %v1660 = vadd.f32 %v1571, %v1659
  %v1661 = vpop.f32.mrf.mxu0
  %v1662 = vadd.f32 %v1573, %v1661
  %1663 = vmatmul.bf16.gmra.mxu0 %v1240
  %v1664 = vpop.f32.mrf.mxu0
  %v1665 = vadd.f32 %v1576, %v1664
  %v1666 = vpop.f32.mrf.mxu0
  %v1667 = vadd.f32 %v1578, %v1666
  %1668 = vmatmul.bf16.gmra.mxu0 %v1244
  %v1669 = vpop.f32.mrf.mxu0
  %v1670 = vadd.f32 %v1581, %v1669
  %v1671 = vpop.f32.mrf.mxu0
  %v1672 = vadd.f32 %v1583, %v1671
  %1673 = vmatmul.bf16.gmra.mxu0 %v1248
  %v1674 = vpop.f32.mrf.mxu0
  %v1675 = vadd.f32 %v1586, %v1674
  %v1676 = vpop.f32.mrf.mxu0
  %v1677 = vadd.f32 %v1588, %v1676
  %1678 = vmatmul.bf16.gmra.mxu0 %v1252
  %v1679 = vpop.f32.mrf.mxu0
  %v1680 = vadd.f32 %v1591, %v1679
  %v1681 = vpop.f32.mrf.mxu0
  %v1682 = vadd.f32 %v1593, %v1681
  %1683 = vmatmul.bf16.gmra.mxu0 %v1256
  %v1684 = vpop.f32.mrf.mxu0
  %v1685 = vadd.f32 %v1596, %v1684
  %v1686 = vpop.f32.mrf.mxu0
  %v1687 = vadd.f32 %v1598, %v1686
  %1688 = vmatmul.bf16.gmra.mxu0 %v1260
  %v1689 = vpop.f32.mrf.mxu0
  %v1690 = vadd.f32 %v1601, %v1689
  %v1691 = vpop.f32.mrf.mxu0
  %v1692 = vadd.f32 %v1603, %v1691
  %1693 = vmatmul.bf16.gmra.mxu0 %v1264
  %v1694 = vpop.f32.mrf.mxu0
  %v1695 = vadd.f32 %v1606, %v1694
  %v1696 = vpop.f32.mrf.mxu0
  %v1697 = vadd.f32 %v1608, %v1696
  %1698 = vmatmul.bf16.gmra.mxu0 %v1268
  %v1699 = vpop.f32.mrf.mxu0
  %v1700 = vadd.f32 %v1611, %v1699
  %v1701 = vpop.f32.mrf.mxu0
  %v1702 = vadd.f32 %v1613, %v1701
  %1703 = vmatmul.bf16.gmra.mxu0 %v1272
  %v1704 = vpop.f32.mrf.mxu0
  %v1705 = vadd.f32 %v1616, %v1704
  %v1706 = vpop.f32.mrf.mxu0
  %v1707 = vadd.f32 %v1618, %v1706
  %1708 = vmatmul.bf16.gmra.mxu0 %v1276
  %v1709 = vpop.f32.mrf.mxu0
  %v1710 = vadd.f32 %v1621, %v1709
  %v1711 = vpop.f32.mrf.mxu0
  %v1712 = vadd.f32 %v1623, %v1711
  %1713 = vmatmul.bf16.gmra.mxu0 %v1280
  %v1714 = vpop.f32.mrf.mxu0
  %v1715 = vadd.f32 %v1626, %v1714
  %v1716 = vpop.f32.mrf.mxu0
  %v1717 = vadd.f32 %v1628, %v1716
  %1718 = vmatmul.bf16.gmra.mxu0 %v1284
  %v1719 = vpop.f32.mrf.mxu0
  %v1720 = vadd.f32 %v1631, %v1719
  %v1721 = vpop.f32.mrf.mxu0
  %v1722 = vadd.f32 %v1633, %v1721
  %1723 = vmatmul.bf16.gmra.mxu0 %v1288
  %v1724 = vpop.f32.mrf.mxu0
  %v1725 = vadd.f32 %v1636, %v1724
  %v1726 = vpop.f32.mrf.mxu0
  %v1727 = vadd.f32 %v1638, %v1726
  %1728 = vdwg.mxu0
  %1729 = vmatpush.bf16.msra.mxu0 %v1510
  %1730 = vmatpush.bf16.msra.mxu0 %v1509
  %1731 = vmatpush.bf16.msra.mxu0 %v1508
  %1732 = vmatpush.bf16.msra.mxu0 %v1507
  %1733 = vmatpush.bf16.msra.mxu0 %v1506
  %1734 = vmatpush.bf16.msra.mxu0 %v1505
  %1735 = vmatpush.bf16.msra.mxu0 %v1504
  %1736 = vmatpush.bf16.msra.mxu0 %v1503
  %1737 = vmatmul.bf16.gmra.mxu0 %v1229
  %v1738 = vpop.f32.mrf.mxu0
  %v1739 = vadd.f32 %v1650, %v1738
  %v1740 = vpop.f32.mrf.mxu0
  %v1741 = vadd.f32 %v1652, %v1740
  %1742 = vmatmul.bf16.gmra.mxu0 %v1233
  %v1743 = vpop.f32.mrf.mxu0
  %v1744 = vadd.f32 %v1655, %v1743
  %v1745 = vpop.f32.mrf.mxu0
  %v1746 = vadd.f32 %v1657, %v1745
  %1747 = vmatmul.bf16.gmra.mxu0 %v1237
  %v1748 = vpop.f32.mrf.mxu0
  %v1749 = vadd.f32 %v1660, %v1748
  %v1750 = vpop.f32.mrf.mxu0
  %v1751 = vadd.f32 %v1662, %v1750
  %1752 = vmatmul.bf16.gmra.mxu0 %v1241
  %v1753 = vpop.f32.mrf.mxu0
  %v1754 = vadd.f32 %v1665, %v1753
  %v1755 = vpop.f32.mrf.mxu0
  %v1756 = vadd.f32 %v1667, %v1755
  %1757 = vmatmul.bf16.gmra.mxu0 %v1245
  %v1758 = vpop.f32.mrf.mxu0
  %v1759 = vadd.f32 %v1670, %v1758
  %v1760 = vpop.f32.mrf.mxu0
  %v1761 = vadd.f32 %v1672, %v1760
  %1762 = vmatmul.bf16.gmra.mxu0 %v1249
  %v1763 = vpop.f32.mrf.mxu0
  %v1764 = vadd.f32 %v1675, %v1763
  %v1765 = vpop.f32.mrf.mxu0
  %v1766 = vadd.f32 %v1677, %v1765
  %1767 = vmatmul.bf16.gmra.mxu0 %v1253
  %v1768 = vpop.f32.mrf.mxu0
  %v1769 = vadd.f32 %v1680, %v1768
  %v1770 = vpop.f32.mrf.mxu0
  %v1771 = vadd.f32 %v1682, %v1770
  %1772 = vmatmul.bf16.gmra.mxu0 %v1257
  %v1773 = vpop.f32.mrf.mxu0
  %v1774 = vadd.f32 %v1685, %v1773
  %v1775 = vpop.f32.mrf.mxu0
  %v1776 = vadd.f32 %v1687, %v1775
  %1777 = vmatmul.bf16.gmra.mxu0 %v1261
  %v1778 = vpop.f32.mrf.mxu0
  %v1779 = vadd.f32 %v1690, %v1778
  %v1780 = vpop.f32.mrf.mxu0
  %v1781 = vadd.f32 %v1692, %v1780
  %1782 = vmatmul.bf16.gmra.mxu0 %v1265
  %v1783 = vpop.f32.mrf.mxu0
  %v1784 = vadd.f32 %v1695, %v1783
  %v1785 = vpop.f32.mrf.mxu0
  %v1786 = vadd.f32 %v1697, %v1785
  %1787 = vmatmul.bf16.gmra.mxu0 %v1269
  %v1788 = vpop.f32.mrf.mxu0
  %v1789 = vadd.f32 %v1700, %v1788
  %v1790 = vpop.f32.mrf.mxu0
  %v1791 = vadd.f32 %v1702, %v1790
  %1792 = vmatmul.bf16.gmra.mxu0 %v1273
  %v1793 = vpop.f32.mrf.mxu0
  %v1794 = vadd.f32 %v1705, %v1793
  %v1795 = vpop.f32.mrf.mxu0
  %v1796 = vadd.f32 %v1707, %v1795
  %1797 = vmatmul.bf16.gmra.mxu0 %v1277
  %v1798 = vpop.f32.mrf.mxu0
  %v1799 = vadd.f32 %v1710, %v1798
  %v1800 = vpop.f32.mrf.mxu0
  %v1801 = vadd.f32 %v1712, %v1800
  %1802 = vmatmul.bf16.gmra.mxu0 %v1281
  %v1803 = vpop.f32.mrf.mxu0
  %v1804 = vadd.f32 %v1715, %v1803
  %v1805 = vpop.f32.mrf.mxu0
  %v1806 = vadd.f32 %v1717, %v1805
  %1807 = vmatmul.bf16.gmra.mxu0 %v1285
  %v1808 = vpop.f32.mrf.mxu0
  %v1809 = vadd.f32 %v1720, %v1808
  %v1810 = vpop.f32.mrf.mxu0
  %v1811 = vadd.f32 %v1722, %v1810
  %1812 = vmatmul.bf16.gmra.mxu0 %v1289
  %v1813 = vpop.f32.mrf.mxu0
  %v1814 = vadd.f32 %v1725, %v1813
  %v1815 = vpop.f32.mrf.mxu0
  %v1816 = vadd.f32 %v1727, %v1815
  %1817 = vdwg.mxu0
  %1818 = vmatpush.bf16.msra.mxu0 %v1518
  %1819 = vmatpush.bf16.msra.mxu0 %v1517
  %1820 = vmatpush.bf16.msra.mxu0 %v1516
  %1821 = vmatpush.bf16.msra.mxu0 %v1515
  %1822 = vmatpush.bf16.msra.mxu0 %v1514
  %1823 = vmatpush.bf16.msra.mxu0 %v1513
  %1824 = vmatpush.bf16.msra.mxu0 %v1512
  %1825 = vmatpush.bf16.msra.mxu0 %v1511
  %1826 = vmatmul.bf16.gmra.mxu0 %v1230
  %v1827 = vpop.f32.mrf.mxu0
  %v1828 = vadd.f32 %v1739, %v1827
  %v1829 = vpop.f32.mrf.mxu0
  %v1830 = vadd.f32 %v1741, %v1829
  %1831 = vmatmul.bf16.gmra.mxu0 %v1234
  %v1832 = vpop.f32.mrf.mxu0
  %v1833 = vadd.f32 %v1744, %v1832
  %v1834 = vpop.f32.mrf.mxu0
  %v1835 = vadd.f32 %v1746, %v1834
  %1836 = vmatmul.bf16.gmra.mxu0 %v1238
  %v1837 = vpop.f32.mrf.mxu0
  %v1838 = vadd.f32 %v1749, %v1837
  %v1839 = vpop.f32.mrf.mxu0
  %v1840 = vadd.f32 %v1751, %v1839
  %1841 = vmatmul.bf16.gmra.mxu0 %v1242
  %v1842 = vpop.f32.mrf.mxu0
  %v1843 = vadd.f32 %v1754, %v1842
  %v1844 = vpop.f32.mrf.mxu0
  %v1845 = vadd.f32 %v1756, %v1844
  %1846 = vmatmul.bf16.gmra.mxu0 %v1246
  %v1847 = vpop.f32.mrf.mxu0
  %v1848 = vadd.f32 %v1759, %v1847
  %v1849 = vpop.f32.mrf.mxu0
  %v1850 = vadd.f32 %v1761, %v1849
  %1851 = vmatmul.bf16.gmra.mxu0 %v1250
  %v1852 = vpop.f32.mrf.mxu0
  %v1853 = vadd.f32 %v1764, %v1852
  %v1854 = vpop.f32.mrf.mxu0
  %v1855 = vadd.f32 %v1766, %v1854
  %1856 = vmatmul.bf16.gmra.mxu0 %v1254
  %v1857 = vpop.f32.mrf.mxu0
  %v1858 = vadd.f32 %v1769, %v1857
  %v1859 = vpop.f32.mrf.mxu0
  %v1860 = vadd.f32 %v1771, %v1859
  %1861 = vmatmul.bf16.gmra.mxu0 %v1258
  %v1862 = vpop.f32.mrf.mxu0
  %v1863 = vadd.f32 %v1774, %v1862
  %v1864 = vpop.f32.mrf.mxu0
  %v1865 = vadd.f32 %v1776, %v1864
  %1866 = vmatmul.bf16.gmra.mxu0 %v1262
  %v1867 = vpop.f32.mrf.mxu0
  %v1868 = vadd.f32 %v1779, %v1867
  %v1869 = vpop.f32.mrf.mxu0
  %v1870 = vadd.f32 %v1781, %v1869
  %1871 = vmatmul.bf16.gmra.mxu0 %v1266
  %v1872 = vpop.f32.mrf.mxu0
  %v1873 = vadd.f32 %v1784, %v1872
  %v1874 = vpop.f32.mrf.mxu0
  %v1875 = vadd.f32 %v1786, %v1874
  %1876 = vmatmul.bf16.gmra.mxu0 %v1270
  %v1877 = vpop.f32.mrf.mxu0
  %v1878 = vadd.f32 %v1789, %v1877
  %v1879 = vpop.f32.mrf.mxu0
  %v1880 = vadd.f32 %v1791, %v1879
  %1881 = vmatmul.bf16.gmra.mxu0 %v1274
  %v1882 = vpop.f32.mrf.mxu0
  %v1883 = vadd.f32 %v1794, %v1882
  %v1884 = vpop.f32.mrf.mxu0
  %v1885 = vadd.f32 %v1796, %v1884
  %1886 = vmatmul.bf16.gmra.mxu0 %v1278
  %v1887 = vpop.f32.mrf.mxu0
  %v1888 = vadd.f32 %v1799, %v1887
  %v1889 = vpop.f32.mrf.mxu0
  %v1890 = vadd.f32 %v1801, %v1889
  %1891 = vmatmul.bf16.gmra.mxu0 %v1282
  %v1892 = vpop.f32.mrf.mxu0
  %v1893 = vadd.f32 %v1804, %v1892
  %v1894 = vpop.f32.mrf.mxu0
  %v1895 = vadd.f32 %v1806, %v1894
  %1896 = vmatmul.bf16.gmra.mxu0 %v1286
  %v1897 = vpop.f32.mrf.mxu0
  %v1898 = vadd.f32 %v1809, %v1897
  %v1899 = vpop.f32.mrf.mxu0
  %v1900 = vadd.f32 %v1811, %v1899
  %1901 = vmatmul.bf16.gmra.mxu0 %v1290
  %v1902 = vpop.f32.mrf.mxu0
  %v1903 = vadd.f32 %v1814, %v1902
  %v1904 = vpop.f32.mrf.mxu0
  %v1905 = vadd.f32 %v1816, %v1904
  %1906 = vdwg.mxu0
  %v1907 = vmax.f32 %v1828, 0.0
  %v1908 = vmax.f32 %v1830, 0.0
  %v1909 = vmax.f32 %v1833, 0.0
  %v1910 = vmax.f32 %v1835, 0.0
  %v1911 = vmax.f32 %v1838, 0.0
  %v1912 = vmax.f32 %v1840, 0.0
  %v1913 = vmax.f32 %v1843, 0.0
  %v1914 = vmax.f32 %v1845, 0.0
  %v1915 = vmax.f32 %v1848, 0.0
  %v1916 = vmax.f32 %v1850, 0.0
  %v1917 = vmax.f32 %v1853, 0.0
  %v1918 = vmax.f32 %v1855, 0.0
  %v1919 = vmax.f32 %v1858, 0.0
  %v1920 = vmax.f32 %v1860, 0.0
  %v1921 = vmax.f32 %v1863, 0.0
  %v1922 = vmax.f32 %v1865, 0.0
  %v1923 = vmax.f32 %v1868, 0.0
  %v1924 = vmax.f32 %v1870, 0.0
  %v1925 = vmax.f32 %v1873, 0.0
  %v1926 = vmax.f32 %v1875, 0.0
  %v1927 = vmax.f32 %v1878, 0.0
  %v1928 = vmax.f32 %v1880, 0.0
  %v1929 = vmax.f32 %v1883, 0.0
  %v1930 = vmax.f32 %v1885, 0.0
  %v1931 = vmax.f32 %v1888, 0.0
  %v1932 = vmax.f32 %v1890, 0.0
  %v1933 = vmax.f32 %v1893, 0.0
  %v1934 = vmax.f32 %v1895, 0.0
  %v1935 = vmax.f32 %v1898, 0.0
  %v1936 = vmax.f32 %v1900, 0.0
  %v1937 = vmax.f32 %v1903, 0.0
  %v1938 = vmax.f32 %v1905, 0.0
  %v1939 = vld [vmem:[%s5] sm:$0x1]
  %v1941 = vperm.slane %v1939, 0
  %v1943 = vmul.f32 %v1907, %v1941
  %v1944 = vmul.f32 %v1908, %v1941
  %v1945 = vmul.f32 %v1909, %v1941
  %v1946 = vmul.f32 %v1910, %v1941
  %v1947 = vmul.f32 %v1911, %v1941
  %v1948 = vmul.f32 %v1912, %v1941
  %v1949 = vmul.f32 %v1913, %v1941
  %v1950 = vmul.f32 %v1914, %v1941
  %v1951 = vmul.f32 %v1915, %v1941
  %v1952 = vmul.f32 %v1916, %v1941
  %v1953 = vmul.f32 %v1917, %v1941
  %v1954 = vmul.f32 %v1918, %v1941
  %v1955 = vmul.f32 %v1919, %v1941
  %v1956 = vmul.f32 %v1920, %v1941
  %v1957 = vmul.f32 %v1921, %v1941
  %v1958 = vmul.f32 %v1922, %v1941
  %v1959 = vmul.f32 %v1923, %v1941
  %v1960 = vmul.f32 %v1924, %v1941
  %v1961 = vmul.f32 %v1925, %v1941
  %v1962 = vmul.f32 %v1926, %v1941
  %v1963 = vmul.f32 %v1927, %v1941
  %v1964 = vmul.f32 %v1928, %v1941
  %v1965 = vmul.f32 %v1929, %v1941
  %v1966 = vmul.f32 %v1930, %v1941
  %v1967 = vmul.f32 %v1931, %v1941
  %v1968 = vmul.f32 %v1932, %v1941
  %v1969 = vmul.f32 %v1933, %v1941
  %v1970 = vmul.f32 %v1934, %v1941
  %v1971 = vmul.f32 %v1935, %v1941
  %v1972 = vmul.f32 %v1936, %v1941
  %v1973 = vmul.f32 %v1937, %v1941
  %v1974 = vmul.f32 %v1938, %v1941
  %1975 = vadd.xlane.f32.xlu0 %v1943
  %v1976 = vpop.xlane.xlu0 %1975
  %1977 = vadd.xlane.f32.xlu0 %v1944
  %v1978 = vpop.xlane.xlu0 %1977
  %1979 = vadd.xlane.f32.xlu0 %v1945
  %v1980 = vpop.xlane.xlu0 %1979
  %1981 = vadd.xlane.f32.xlu0 %v1946
  %v1982 = vpop.xlane.xlu0 %1981
  %1983 = vadd.xlane.f32.xlu0 %v1947
  %v1984 = vpop.xlane.xlu0 %1983
  %1985 = vadd.xlane.f32.xlu0 %v1948
  %v1986 = vpop.xlane.xlu0 %1985
  %1987 = vadd.xlane.f32.xlu0 %v1949
  %v1988 = vpop.xlane.xlu0 %1987
  %1989 = vadd.xlane.f32.xlu0 %v1950
  %v1990 = vpop.xlane.xlu0 %1989
  %1991 = vadd.xlane.f32.xlu0 %v1951
  %v1992 = vpop.xlane.xlu0 %1991
  %1993 = vadd.xlane.f32.xlu0 %v1952
  %v1994 = vpop.xlane.xlu0 %1993
  %1995 = vadd.xlane.f32.xlu0 %v1953
  %v1996 = vpop.xlane.xlu0 %1995
  %1997 = vadd.xlane.f32.xlu0 %v1954
  %v1998 = vpop.xlane.xlu0 %1997
  %1999 = vadd.xlane.f32.xlu0 %v1955
  %v2000 = vpop.xlane.xlu0 %1999
  %2001 = vadd.xlane.f32.xlu0 %v1956
  %v2002 = vpop.xlane.xlu0 %2001
  %2003 = vadd.xlane.f32.xlu0 %v1957
  %v2004 = vpop.xlane.xlu0 %2003
  %2005 = vadd.xlane.f32.xlu0 %v1958
  %v2006 = vpop.xlane.xlu0 %2005
  %2007 = vadd.xlane.f32.xlu0 %v1959
  %v2008 = vpop.xlane.xlu0 %2007
  %2009 = vadd.xlane.f32.xlu0 %v1960
  %v2010 = vpop.xlane.xlu0 %2009
  %2011 = vadd.xlane.f32.xlu0 %v1961
  %v2012 = vpop.xlane.xlu0 %2011
  %2013 = vadd.xlane.f32.xlu0 %v1962
  %v2014 = vpop.xlane.xlu0 %2013
  %2015 = vadd.xlane.f32.xlu0 %v1963
  %v2016 = vpop.xlane.xlu0 %2015
  %2017 = vadd.xlane.f32.xlu0 %v1964
  %v2018 = vpop.xlane.xlu0 %2017
  %2019 = vadd.xlane.f32.xlu0 %v1965
  %v2020 = vpop.xlane.xlu0 %2019
  %2021 = vadd.xlane.f32.xlu0 %v1966
  %v2022 = vpop.xlane.xlu0 %2021
  %2023 = vadd.xlane.f32.xlu0 %v1967
  %v2024 = vpop.xlane.xlu0 %2023
  %2025 = vadd.xlane.f32.xlu0 %v1968
  %v2026 = vpop.xlane.xlu0 %2025
  %2027 = vadd.xlane.f32.xlu0 %v1969
  %v2028 = vpop.xlane.xlu0 %2027
  %2029 = vadd.xlane.f32.xlu0 %v1970
  %v2030 = vpop.xlane.xlu0 %2029
  %2031 = vadd.xlane.f32.xlu0 %v1971
  %v2032 = vpop.xlane.xlu0 %2031
  %2033 = vadd.xlane.f32.xlu0 %v1972
  %v2034 = vpop.xlane.xlu0 %2033
  %2035 = vadd.xlane.f32.xlu0 %v1973
  %v2036 = vpop.xlane.xlu0 %2035
  %2037 = vadd.xlane.f32.xlu0 %v1974
  %v2038 = vpop.xlane.xlu0 %2037
  %s2039 = sld [smem:[#allocation2]]
  %v2040 = vstv %s2039
  %v2041 = vadd.f32 %v1976, %v2040
  %v2042 = vadd.f32 %v1978, %v2040
  %v2043 = vadd.f32 %v1980, %v2040
  %v2044 = vadd.f32 %v1982, %v2040
  %v2045 = vadd.f32 %v1984, %v2040
  %v2046 = vadd.f32 %v1986, %v2040
  %v2047 = vadd.f32 %v1988, %v2040
  %v2048 = vadd.f32 %v1990, %v2040
  %v2049 = vadd.f32 %v1992, %v2040
  %v2050 = vadd.f32 %v1994, %v2040
  %v2051 = vadd.f32 %v1996, %v2040
  %v2052 = vadd.f32 %v1998, %v2040
  %v2053 = vadd.f32 %v2000, %v2040
  %v2054 = vadd.f32 %v2002, %v2040
  %v2055 = vadd.f32 %v2004, %v2040
  %v2056 = vadd.f32 %v2006, %v2040
  %v2057 = vadd.f32 %v2008, %v2040
  %v2058 = vadd.f32 %v2010, %v2040
  %v2059 = vadd.f32 %v2012, %v2040
  %v2060 = vadd.f32 %v2014, %v2040
  %v2061 = vadd.f32 %v2016, %v2040
  %v2062 = vadd.f32 %v2018, %v2040
  %v2063 = vadd.f32 %v2020, %v2040
  %v2064 = vadd.f32 %v2022, %v2040
  %v2065 = vadd.f32 %v2024, %v2040
  %v2066 = vadd.f32 %v2026, %v2040
  %v2067 = vadd.f32 %v2028, %v2040
  %v2068 = vadd.f32 %v2030, %v2040
  %v2069 = vadd.f32 %v2032, %v2040
  %v2070 = vadd.f32 %v2034, %v2040
  %v2071 = vadd.f32 %v2036, %v2040
  %v2072 = vadd.f32 %v2038, %v2040
  %v2073 = vmax.f32 %v2041, 0.0
  %v2074 = vmax.f32 %v2042, 0.0
  %v2075 = vmax.f32 %v2043, 0.0
  %v2076 = vmax.f32 %v2044, 0.0
  %v2077 = vmax.f32 %v2045, 0.0
  %v2078 = vmax.f32 %v2046, 0.0
  %v2079 = vmax.f32 %v2047, 0.0
  %v2080 = vmax.f32 %v2048, 0.0
  %v2081 = vmax.f32 %v2049, 0.0
  %v2082 = vmax.f32 %v2050, 0.0
  %v2083 = vmax.f32 %v2051, 0.0
  %v2084 = vmax.f32 %v2052, 0.0
  %v2085 = vmax.f32 %v2053, 0.0
  %v2086 = vmax.f32 %v2054, 0.0
  %v2087 = vmax.f32 %v2055, 0.0
  %v2088 = vmax.f32 %v2056, 0.0
  %v2089 = vmax.f32 %v2057, 0.0
  %v2090 = vmax.f32 %v2058, 0.0
  %v2091 = vmax.f32 %v2059, 0.0
  %v2092 = vmax.f32 %v2060, 0.0
  %v2093 = vmax.f32 %v2061, 0.0
  %v2094 = vmax.f32 %v2062, 0.0
  %v2095 = vmax.f32 %v2063, 0.0
  %v2096 = vmax.f32 %v2064, 0.0
  %v2097 = vmax.f32 %v2065, 0.0
  %v2098 = vmax.f32 %v2066, 0.0
  %v2099 = vmax.f32 %v2067, 0.0
  %v2100 = vmax.f32 %v2068, 0.0
  %v2101 = vmax.f32 %v2069, 0.0
  %v2102 = vmax.f32 %v2070, 0.0
  %v2103 = vmax.f32 %v2071, 0.0
  %v2104 = vmax.f32 %v2072, 0.0
  %v2105 = vsub.f32 0.0, %v2073
  %v2106 = vsub.f32 0.0, %v2074
  %v2107 = vsub.f32 0.0, %v2075
  %v2108 = vsub.f32 0.0, %v2076
  %v2109 = vsub.f32 0.0, %v2077
  %v2110 = vsub.f32 0.0, %v2078
  %v2111 = vsub.f32 0.0, %v2079
  %v2112 = vsub.f32 0.0, %v2080
  %v2113 = vsub.f32 0.0, %v2081
  %v2114 = vsub.f32 0.0, %v2082
  %v2115 = vsub.f32 0.0, %v2083
  %v2116 = vsub.f32 0.0, %v2084
  %v2117 = vsub.f32 0.0, %v2085
  %v2118 = vsub.f32 0.0, %v2086
  %v2119 = vsub.f32 0.0, %v2087
  %v2120 = vsub.f32 0.0, %v2088
  %v2121 = vsub.f32 0.0, %v2089
  %v2122 = vsub.f32 0.0, %v2090
  %v2123 = vsub.f32 0.0, %v2091
  %v2124 = vsub.f32 0.0, %v2092
  %v2125 = vsub.f32 0.0, %v2093
  %v2126 = vsub.f32 0.0, %v2094
  %v2127 = vsub.f32 0.0, %v2095
  %v2128 = vsub.f32 0.0, %v2096
  %v2129 = vsub.f32 0.0, %v2097
  %v2130 = vsub.f32 0.0, %v2098
  %v2131 = vsub.f32 0.0, %v2099
  %v2132 = vsub.f32 0.0, %v2100
  %v2133 = vsub.f32 0.0, %v2101
  %v2134 = vsub.f32 0.0, %v2102
  %v2135 = vsub.f32 0.0, %v2103
  %v2136 = vsub.f32 0.0, %v2104
  %v2137 = vmul.f32 %v2105, 1.442695
  %v2138 = vpow.pop %v2137
  %v2139 = vmul.f32 %v2106, 1.442695
  %v2140 = vpow.pop %v2139
  %v2141 = vmul.f32 %v2107, 1.442695
  %v2142 = vpow.pop %v2141
  %v2143 = vmul.f32 %v2108, 1.442695
  %v2144 = vpow.pop %v2143
  %v2145 = vmul.f32 %v2109, 1.442695
  %v2146 = vpow.pop %v2145
  %v2147 = vmul.f32 %v2110, 1.442695
  %v2148 = vpow.pop %v2147
  %v2149 = vmul.f32 %v2111, 1.442695
  %v2150 = vpow.pop %v2149
  %v2151 = vmul.f32 %v2112, 1.442695
  %v2152 = vpow.pop %v2151
  %v2153 = vmul.f32 %v2113, 1.442695
  %v2154 = vpow.pop %v2153
  %v2155 = vmul.f32 %v2114, 1.442695
  %v2156 = vpow.pop %v2155
  %v2157 = vmul.f32 %v2115, 1.442695
  %v2158 = vpow.pop %v2157
  %v2159 = vmul.f32 %v2116, 1.442695
  %v2160 = vpow.pop %v2159
  %v2161 = vmul.f32 %v2117, 1.442695
  %v2162 = vpow.pop %v2161
  %v2163 = vmul.f32 %v2118, 1.442695
  %v2164 = vpow.pop %v2163
  %v2165 = vmul.f32 %v2119, 1.442695
  %v2166 = vpow.pop %v2165
  %v2167 = vmul.f32 %v2120, 1.442695
  %v2168 = vpow.pop %v2167
  %v2169 = vmul.f32 %v2121, 1.442695
  %v2170 = vpow.pop %v2169
  %v2171 = vmul.f32 %v2122, 1.442695
  %v2172 = vpow.pop %v2171
  %v2173 = vmul.f32 %v2123, 1.442695
  %v2174 = vpow.pop %v2173
  %v2175 = vmul.f32 %v2124, 1.442695
  %v2176 = vpow.pop %v2175
  %v2177 = vmul.f32 %v2125, 1.442695
  %v2178 = vpow.pop %v2177
  %v2179 = vmul.f32 %v2126, 1.442695
  %v2180 = vpow.pop %v2179
  %v2181 = vmul.f32 %v2127, 1.442695
  %v2182 = vpow.pop %v2181
  %v2183 = vmul.f32 %v2128, 1.442695
  %v2184 = vpow.pop %v2183
  %v2185 = vmul.f32 %v2129, 1.442695
  %v2186 = vpow.pop %v2185
  %v2187 = vmul.f32 %v2130, 1.442695
  %v2188 = vpow.pop %v2187
  %v2189 = vmul.f32 %v2131, 1.442695
  %v2190 = vpow.pop %v2189
  %v2191 = vmul.f32 %v2132, 1.442695
  %v2192 = vpow.pop %v2191
  %v2193 = vmul.f32 %v2133, 1.442695
  %v2194 = vpow.pop %v2193
  %v2195 = vmul.f32 %v2134, 1.442695
  %v2196 = vpow.pop %v2195
  %v2197 = vmul.f32 %v2135, 1.442695
  %v2198 = vpow.pop %v2197
  %v2199 = vmul.f32 %v2136, 1.442695
  %v2200 = vpow.pop %v2199
  %v2201 = vadd.f32 %v2138, 1.0
  %v2202 = vadd.f32 %v2140, 1.0
  %v2203 = vadd.f32 %v2142, 1.0
  %v2204 = vadd.f32 %v2144, 1.0
  %v2205 = vadd.f32 %v2146, 1.0
  %v2206 = vadd.f32 %v2148, 1.0
  %v2207 = vadd.f32 %v2150, 1.0
  %v2208 = vadd.f32 %v2152, 1.0
  %v2209 = vadd.f32 %v2154, 1.0
  %v2210 = vadd.f32 %v2156, 1.0
  %v2211 = vadd.f32 %v2158, 1.0
  %v2212 = vadd.f32 %v2160, 1.0
  %v2213 = vadd.f32 %v2162, 1.0
  %v2214 = vadd.f32 %v2164, 1.0
  %v2215 = vadd.f32 %v2166, 1.0
  %v2216 = vadd.f32 %v2168, 1.0
  %v2217 = vadd.f32 %v2170, 1.0
  %v2218 = vadd.f32 %v2172, 1.0
  %v2219 = vadd.f32 %v2174, 1.0
  %v2220 = vadd.f32 %v2176, 1.0
  %v2221 = vadd.f32 %v2178, 1.0
  %v2222 = vadd.f32 %v2180, 1.0
  %v2223 = vadd.f32 %v2182, 1.0
  %v2224 = vadd.f32 %v2184, 1.0
  %v2225 = vadd.f32 %v2186, 1.0
  %v2226 = vadd.f32 %v2188, 1.0
  %v2227 = vadd.f32 %v2190, 1.0
  %v2228 = vadd.f32 %v2192, 1.0
  %v2229 = vadd.f32 %v2194, 1.0
  %v2230 = vadd.f32 %v2196, 1.0
  %v2231 = vadd.f32 %v2198, 1.0
  %v2232 = vadd.f32 %v2200, 1.0
  %v2233 = vrcp.pop %v2201
  %v2234 = vrcp.pop %v2202
  %v2235 = vrcp.pop %v2203
  %v2236 = vrcp.pop %v2204
  %v2237 = vrcp.pop %v2205
  %v2238 = vrcp.pop %v2206
  %v2239 = vrcp.pop %v2207
  %v2240 = vrcp.pop %v2208
  %v2241 = vrcp.pop %v2209
  %v2242 = vrcp.pop %v2210
  %v2243 = vrcp.pop %v2211
  %v2244 = vrcp.pop %v2212
  %v2245 = vrcp.pop %v2213
  %v2246 = vrcp.pop %v2214
  %v2247 = vrcp.pop %v2215
  %v2248 = vrcp.pop %v2216
  %v2249 = vrcp.pop %v2217
  %v2250 = vrcp.pop %v2218
  %v2251 = vrcp.pop %v2219
  %v2252 = vrcp.pop %v2220
  %v2253 = vrcp.pop %v2221
  %v2254 = vrcp.pop %v2222
  %v2255 = vrcp.pop %v2223
  %v2256 = vrcp.pop %v2224
  %v2257 = vrcp.pop %v2225
  %v2258 = vrcp.pop %v2226
  %v2259 = vrcp.pop %v2227
  %v2260 = vrcp.pop %v2228
  %v2261 = vrcp.pop %v2229
  %v2262 = vrcp.pop %v2230
  %v2263 = vrcp.pop %v2231
  %v2264 = vrcp.pop %v2232
  %v2297 = vlaneseq
  %v2298 = vand.u32 %v2297, 127
  %v2299 = vperm.slane %v2233, %v2298
  %v2300 = vadd.s32 %v2298, 4294967288
  %v2301 = vperm.slane %v2234, %v2300
  %vm2302 = vcmask 130112
  %v2303 = vsel %vm2302, %v2301, %v2299
  %v2304 = vadd.s32 %v2298, 4294967280
  %v2305 = vperm.slane %v2235, %v2304
  %vm2306 = vcmask 195712
  %v2307 = vsel %vm2306, %v2305, %v2303
  %v2308 = vadd.s32 %v2298, 4294967272
  %v2309 = vperm.slane %v2236, %v2308
  %vm2310 = vcmask 261312
  %v2311 = vsel %vm2310, %v2309, %v2307
  %v2312 = vadd.s32 %v2298, 4294967264
  %v2313 = vperm.slane %v2237, %v2312
  %vm2314 = vcmask 326912
  %v2315 = vsel %vm2314, %v2313, %v2311
  %v2316 = vadd.s32 %v2298, 4294967256
  %v2317 = vperm.slane %v2238, %v2316
  %vm2318 = vcmask 392512
  %v2319 = vsel %vm2318, %v2317, %v2315
  %v2320 = vadd.s32 %v2298, 4294967248
  %v2321 = vperm.slane %v2239, %v2320
  %vm2322 = vcmask 458112
  %v2323 = vsel %vm2322, %v2321, %v2319
  %v2324 = vadd.s32 %v2298, 4294967240
  %v2325 = vperm.slane %v2240, %v2324
  %vm2326 = vcmask 523712
  %v2327 = vsel %vm2326, %v2325, %v2323
  %v2328 = vadd.s32 %v2298, 4294967232
  %v2329 = vperm.slane %v2241, %v2328
  %vm2330 = vcmask 589312
  %v2331 = vsel %vm2330, %v2329, %v2327
  %v2332 = vadd.s32 %v2298, 4294967224
  %v2333 = vperm.slane %v2242, %v2332
  %vm2334 = vcmask 654912
  %v2335 = vsel %vm2334, %v2333, %v2331
  %v2336 = vadd.s32 %v2298, 4294967216
  %v2337 = vperm.slane %v2243, %v2336
  %vm2338 = vcmask 720512
  %v2339 = vsel %vm2338, %v2337, %v2335
  %v2340 = vadd.s32 %v2298, 4294967208
  %v2341 = vperm.slane %v2244, %v2340
  %vm2342 = vcmask 786112
  %v2343 = vsel %vm2342, %v2341, %v2339
  %v2344 = vadd.s32 %v2298, 4294967200
  %v2345 = vperm.slane %v2245, %v2344
  %vm2346 = vcmask 851712
  %v2347 = vsel %vm2346, %v2345, %v2343
  %v2348 = vadd.s32 %v2298, 4294967192
  %v2349 = vperm.slane %v2246, %v2348
  %vm2350 = vcmask 917312
  %v2351 = vsel %vm2350, %v2349, %v2347
  %v2352 = vadd.s32 %v2298, 4294967184
  %v2353 = vperm.slane %v2247, %v2352
  %vm2354 = vcmask 982912
  %v2355 = vsel %vm2354, %v2353, %v2351
  %v2356 = vadd.s32 %v2298, 4294967176
  %v2357 = vperm.slane %v2248, %v2356
  %vm2358 = vcmask 1048512
  %v2359 = vsel %vm2358, %v2357, %v2355
  %v2360 = vperm.slane %v2249, %v2298
  %v2361 = vperm.slane %v2250, %v2300
  %v2362 = vsel %vm2302, %v2361, %v2360
  %v2363 = vperm.slane %v2251, %v2304
  %v2364 = vsel %vm2306, %v2363, %v2362
  %v2365 = vperm.slane %v2252, %v2308
  %v2366 = vsel %vm2310, %v2365, %v2364
  %v2367 = vperm.slane %v2253, %v2312
  %v2368 = vsel %vm2314, %v2367, %v2366
  %v2369 = vperm.slane %v2254, %v2316
  %v2370 = vsel %vm2318, %v2369, %v2368
  %v2371 = vperm.slane %v2255, %v2320
  %v2372 = vsel %vm2322, %v2371, %v2370
  %v2373 = vperm.slane %v2256, %v2324
  %v2374 = vsel %vm2326, %v2373, %v2372
  %v2375 = vperm.slane %v2257, %v2328
  %v2376 = vsel %vm2330, %v2375, %v2374
  %v2377 = vperm.slane %v2258, %v2332
  %v2378 = vsel %vm2334, %v2377, %v2376
  %v2379 = vperm.slane %v2259, %v2336
  %v2380 = vsel %vm2338, %v2379, %v2378
  %v2381 = vperm.slane %v2260, %v2340
  %v2382 = vsel %vm2342, %v2381, %v2380
  %v2383 = vperm.slane %v2261, %v2344
  %v2384 = vsel %vm2346, %v2383, %v2382
  %v2385 = vperm.slane %v2262, %v2348
  %v2386 = vsel %vm2350, %v2385, %v2384
  %v2387 = vperm.slane %v2263, %v2352
  %v2388 = vsel %vm2354, %v2387, %v2386
  %v2389 = vperm.slane %v2264, %v2356
  %v2390 = vsel %vm2358, %v2389, %v2388
  %v2425 = vperm.slane %v200, %v2298
  %v2426 = vperm.slane %v212, %v2300
  %v2427 = vsel %vm2302, %v2426, %v2425
  %v2428 = vperm.slane %v224, %v2304
  %v2429 = vsel %vm2306, %v2428, %v2427
  %v2430 = vperm.slane %v236, %v2308
  %v2431 = vsel %vm2310, %v2430, %v2429
  %v2432 = vperm.slane %v248, %v2312
  %v2433 = vsel %vm2314, %v2432, %v2431
  %v2434 = vperm.slane %v260, %v2316
  %v2435 = vsel %vm2318, %v2434, %v2433
  %v2436 = vperm.slane %v272, %v2320
  %v2437 = vsel %vm2322, %v2436, %v2435
  %v2438 = vperm.slane %v284, %v2324
  %v2439 = vsel %vm2326, %v2438, %v2437
  %v2440 = vperm.slane %v296, %v2328
  %v2441 = vsel %vm2330, %v2440, %v2439
  %v2442 = vperm.slane %v308, %v2332
  %v2443 = vsel %vm2334, %v2442, %v2441
  %v2444 = vperm.slane %v320, %v2336
  %v2445 = vsel %vm2338, %v2444, %v2443
  %v2446 = vperm.slane %v332, %v2340
  %v2447 = vsel %vm2342, %v2446, %v2445
  %v2448 = vperm.slane %v344, %v2344
  %v2449 = vsel %vm2346, %v2448, %v2447
  %v2450 = vperm.slane %v356, %v2348
  %v2451 = vsel %vm2350, %v2450, %v2449
  %v2452 = vperm.slane %v368, %v2352
  %v2453 = vsel %vm2354, %v2452, %v2451
  %v2454 = vperm.slane %v380, %v2356
  %v2455 = vsel %vm2358, %v2454, %v2453
  %v2456 = vperm.slane %v392, %v2298
  %v2457 = vperm.slane %v404, %v2300
  %v2458 = vsel %vm2302, %v2457, %v2456
  %v2459 = vperm.slane %v416, %v2304
  %v2460 = vsel %vm2306, %v2459, %v2458
  %v2461 = vperm.slane %v428, %v2308
  %v2462 = vsel %vm2310, %v2461, %v2460
  %v2463 = vperm.slane %v440, %v2312
  %v2464 = vsel %vm2314, %v2463, %v2462
  %v2465 = vperm.slane %v452, %v2316
  %v2466 = vsel %vm2318, %v2465, %v2464
  %v2467 = vperm.slane %v464, %v2320
  %v2468 = vsel %vm2322, %v2467, %v2466
  %v2469 = vperm.slane %v476, %v2324
  %v2470 = vsel %vm2326, %v2469, %v2468
  %v2471 = vperm.slane %v488, %v2328
  %v2472 = vsel %vm2330, %v2471, %v2470
  %v2473 = vperm.slane %v500, %v2332
  %v2474 = vsel %vm2334, %v2473, %v2472
  %v2475 = vperm.slane %v512, %v2336
  %v2476 = vsel %vm2338, %v2475, %v2474
  %v2477 = vperm.slane %v524, %v2340
  %v2478 = vsel %vm2342, %v2477, %v2476
  %v2479 = vperm.slane %v536, %v2344
  %v2480 = vsel %vm2346, %v2479, %v2478
  %v2481 = vperm.slane %v548, %v2348
  %v2482 = vsel %vm2350, %v2481, %v2480
  %v2483 = vperm.slane %v560, %v2352
  %v2484 = vsel %vm2354, %v2483, %v2482
  %v2485 = vperm.slane %v572, %v2356
  %v2486 = vsel %vm2358, %v2485, %v2484
  %vm2489 = vcmask 1040384
  %v2490 = vsel %vm2489, %v2359, %v2455
  %v2491 = vsel %vm2489, %v2390, %v2486
  %v2494 = vrot.slane %v2491, 6
  %vm2495 = vcmask 1041408
  %v2496 = vsel %vm2495, %v2490, %v2494
  %2498 = vst [vmem:[%s7] sm:$0xf] %v2496
  // Predicated region
  $region30: #{forward.1} parent=0 // pred_check
    _
  $region31: #{forward.1} parent=0 // pred_check_branch
    %2500 = sbr.rel (0) target = $region33
  $region32: #{forward.1} parent=0 // pred_region
    _
  $region33: #{forward.1} parent=0 // pred_fallthru
    _
  // Predicated region
  $region34: #{forward.1} parent=0 // pred_check
    _
  $region35: #{forward.1} parent=0 // pred_check_branch
    %2502 = sbr.rel (0) target = $region37
  $region36: #{forward.1} parent=0 // pred_region
    _
  $region37: #{forward.1} parent=0 // pred_fallthru
    _

</llo_original>
